<compile_context>
chip_gen: v6e
topology: v6e:2x2x1
jax: 0.10.0
libtpu: 0.0.40
codegen_flags: <defaults>
</compile_context>

<pallas_src>
import math

import jax
import jax.numpy as jnp
from jax import lax
from jax.experimental import pallas as pl
from jax.experimental.pallas import tpu as pltpu

# ------------------------- configuration (module __init__ args) ------------------------
NUM_BLOCKS = 2
HIDDEN = 32
FFN = 64
NUM_HEADS = 4
D_K = HIDDEN // NUM_HEADS
CONTEXT_DEPTH = 2
RANDOM_CONNECTION_RATIO = 0.5
LN_EPS = 1e-5

assert FFN >= HIDDEN  # packed-vector slab pads HIDDEN-wide rows up to FFN lanes

# slab A lane layout (per block): [Wqkv (3H lanes) | W1 (FFN lanes)] -> (H, 3H + FFN)
SLAB_A_COLS = 3 * HIDDEN + FFN
# slab B row layout  (per block): [W2 (FFN rows) ; Wo (H rows)]      -> (FFN + H, H)
SLAB_B_ROWS = FFN + HIDDEN

# rows of the packed per-block vector slab (shape (6, FFN))
_ROW_B1, _ROW_B2, _ROW_G1, _ROW_BE1, _ROW_G2, _ROW_BE2 = range(6)


# ------------------------------- in-kernel math helpers --------------------------------
def _erf(x):
    # Abramowitz & Stegun 7.1.26 polynomial erf approximation (|err| < 1.5e-7).
    # Kept instead of lax.erf: guaranteed to lower on Mosaic (exp/mul/add/select only).
    a1, a2, a3, a4, a5 = 0.254829592, -0.284496736, 1.421413741, -1.453152027, 1.061405429
    p = 0.3275911
    sgn = jnp.where(x >= 0.0, 1.0, -1.0)
    ax = jnp.abs(x)
    # EUP approx reciprocal instead of a VPU divide (polynomial tolerates the ~1e-4 err).
    t = pl.reciprocal(1.0 + p * ax, approx=True)
    poly = t * (a1 + t * (a2 + t * (a3 + t * (a4 + t * a5))))
    return sgn * (1.0 - poly * jnp.exp(-ax * ax))


def _gelu_exact(x):
    # F.gelu default (exact, erf-based).
    return 0.5 * x * (1.0 + _erf(x * (1.0 / math.sqrt(2.0))))


def _layernorm(x, gamma, beta):
    mu = jnp.mean(x, axis=-1, keepdims=True)
    var = jnp.mean((x - mu) ** 2, axis=-1, keepdims=True)
    return (x - mu) * lax.rsqrt(var + LN_EPS) * gamma + beta


# ------------------------------------ Pallas kernel ------------------------------------
def fused_hsgt_kernel(x_ref, bias_ref, slab_a_ref, slab_b_ref, vec_ref, o_ref):
    """Single invocation: both TransformerBlocks statically unrolled, x kept in vregs."""
    x = x_ref[...]                       # (N, H)
    bias = bias_ref[...]                 # (N, N)
    scale = 1.0 / math.sqrt(D_K)

    for blk in range(NUM_BLOCKS):        # static unroll -> no grid, no pipeline overhead
        slab_a = slab_a_ref[blk]         # (H, 3H + FFN)
        slab_b = slab_b_ref[blk]         # (FFN + H, H)
        vec = vec_ref[blk]               # (6, FFN)

        wqkv = slab_a[:, 0:3 * HIDDEN]                  # (H, 3H)
        w1 = slab_a[:, 3 * HIDDEN:SLAB_A_COLS]          # (H, FFN)
        w2 = slab_b[0:FFN, :]                           # (FFN, H)
        wo = slab_b[FFN:SLAB_B_ROWS, :]                 # (H, H)

        b1 = vec[_ROW_B1:_ROW_B1 + 1, :]                # (1, FFN)
        b2 = vec[_ROW_B2:_ROW_B2 + 1, 0:HIDDEN]         # (1, H)
        g1 = vec[_ROW_G1:_ROW_G1 + 1, 0:HIDDEN]
        be1 = vec[_ROW_BE1:_ROW_BE1 + 1, 0:HIDDEN]
        g2 = vec[_ROW_G2:_ROW_G2 + 1, 0:HIDDEN]
        be2 = vec[_ROW_BE2:_ROW_BE2 + 1, 0:HIDDEN]

        # Fused QKV projection: one (N,H) @ (H,3H) MXU matmul, then static lane slices.
        qkv = jnp.dot(x, wqkv, preferred_element_type=jnp.float32)
        q = qkv[:, 0 * HIDDEN:1 * HIDDEN]
        k = qkv[:, 1 * HIDDEN:2 * HIDDEN]
        v = qkv[:, 2 * HIDDEN:3 * HIDDEN]

        # Per-head softmax attention ('n (h d) -> h n d' via static lane slices),
        # heads concatenated once, then a SINGLE output-projection matmul.
        heads = []
        for h in range(NUM_HEADS):       # static unrolled
            lo = h * D_K
            qh = q[:, lo:lo + D_K]
            kh = k[:, lo:lo + D_K]
            vh = v[:, lo:lo + D_K]
            # contract last dims of q_h, k_h -> no in-kernel transpose of k_h
            s = lax.dot_general(qh, kh, (((1,), (1,)), ((), ())),
                                preferred_element_type=jnp.float32) * scale + bias
            s_max = jnp.max(s, axis=-1, keepdims=True)
            p = jnp.exp(s - s_max)
            inv = pl.reciprocal(jnp.sum(p, axis=-1, keepdims=True), approx=True)
            heads.append(jnp.dot(p * inv, vh, preferred_element_type=jnp.float32))

        hv = jnp.concatenate(heads, axis=-1)                        # (N, H) lane concat
        attn = jnp.dot(hv, wo, preferred_element_type=jnp.float32)  # one o_proj matmul

        x1 = x + attn                                               # residual 1 (dropout=id)

        xn = _layernorm(x1, g1, be1)                                # norm1
        h1 = _gelu_exact(jnp.dot(xn, w1, preferred_element_type=jnp.float32) + b1)
        h2 = jnp.dot(h1, w2, preferred_element_type=jnp.float32) + b2
        x2 = x1 + h2                                                # residual 2 (dropout=id)

        x = _layernorm(x2, g2, be2)                                 # norm2 -> next block

    o_ref[...] = x.astype(o_ref.dtype)


def run_horizontal_transformer(x, bias, stacked):
    """Runs all NUM_BLOCKS transformer blocks in one un-gridded pallas_call."""
    N, H = x.shape
    slab_a, slab_b, vecs = stacked
    vmem = lambda: pl.BlockSpec(memory_space=pltpu.MemorySpace.VMEM)  # whole array in VMEM
    return pl.pallas_call(
        fused_hsgt_kernel,
        out_shape=jax.ShapeDtypeStruct((N, H), jnp.float32),
        in_specs=[vmem(), vmem(), vmem(), vmem(), vmem()],
        out_specs=vmem(),
    )(x, bias, slab_a, slab_b, vecs)


# -------------------------- structural encoder (plain-JAX glue) -------------------------
def structural_encoder_bias(key, edge_index, num_nodes, struct_emb):
    # torch.rand replicated with jax.random (same distribution, different RNG stream).
    rnd = jax.random.uniform(key, (num_nodes, num_nodes), dtype=jnp.float32)
    bias = jnp.where(rnd > RANDOM_CONNECTION_RATIO, -jnp.inf, 0.0).astype(jnp.float32)

    if edge_index.size == 0 or CONTEXT_DEPTH == 0:
        eye = jnp.eye(num_nodes, dtype=jnp.float32)
        return jnp.where(eye > 0, 0.0, bias)

    # to_dense_adj(to_undirected(edge_index))
    src, dst = edge_index[0], edge_index[1]
    adj = jnp.zeros((num_nodes, num_nodes), jnp.float32)
    adj = adj.at[src, dst].set(1.0)
    adj = adj.at[dst, src].set(1.0)

    multihop = [adj, jnp.eye(num_nodes, dtype=jnp.float32)]
    for _ in range(CONTEXT_DEPTH - 1):
        multihop.insert(0, multihop[0] @ adj)
    # later (closer-hop) assignments override earlier (farther-hop) ones;
    # identity hop uses struct_emb[0] == 0 (padding row) -> diagonal is always finite,
    # so no attention row can be entirely -inf (no NaN softmax rows).
    for u, d in enumerate(multihop):
        val = struct_emb[CONTEXT_DEPTH - u, 0]
        bias = jnp.where(d > 0, val, bias)
    return bias


# ------------------------------ deterministic parameter init ----------------------------
def init_params(key):
    def linear(k, fan_in, fan_out, with_bias):
        kw, kb = jax.random.split(k)
        bound = 1.0 / math.sqrt(fan_in)
        w = jax.random.uniform(kw, (fan_in, fan_out), jnp.float32, -bound, bound)
        b = jax.random.uniform(kb, (1, fan_out), jnp.float32, -bound, bound) if with_bias else None
        return w, b

    params = []
    for bk in jax.random.split(key, NUM_BLOCKS):
        ks = jax.random.split(bk, 6)
        wq, _ = linear(ks[0], HIDDEN, HIDDEN, False)
        wk, _ = linear(ks[1], HIDDEN, HIDDEN, False)
        wv, _ = linear(ks[2], HIDDEN, HIDDEN, False)
        wo, _ = linear(ks[3], HIDDEN, HIDDEN, False)
        w1, b1 = linear(ks[4], HIDDEN, FFN, True)
        w2, b2 = linear(ks[5], FFN, HIDDEN, True)
        params.append(dict(
            wq=wq, wk=wk, wv=wv, wo=wo, w1=w1, b1=b1, w2=w2, b2=b2,
            g1=jnp.ones((1, HIDDEN), jnp.float32), be1=jnp.zeros((1, HIDDEN), jnp.float32),
            g2=jnp.ones((1, HIDDEN), jnp.float32), be2=jnp.zeros((1, HIDDEN), jnp.float32)))
    return params


def stack_params(params):
    """Stack per-block params into three slabs with a leading block axis."""
    def pad_to_ffn(v):                                   # (1, HIDDEN) -> (1, FFN)
        return jnp.pad(v, ((0, 0), (0, FFN - HIDDEN)))

    def vec_slab(p):                                     # (6, FFN)
        return jnp.concatenate([
            p["b1"].reshape(1, FFN),
            pad_to_ffn(p["b2"]),
            pad_to_ffn(p["g1"]), pad_to_ffn(p["be1"]),
            pad_to_ffn(p["g2"]), pad_to_ffn(p["be2"]),
        ], axis=0)

    # slab A: [Wq | Wk | Wv | W1] along lanes -> (H, 3H + FFN) per block
    slab_a = jnp.stack([jnp.concatenate([p["wq"], p["wk"], p["wv"], p["w1"]], axis=1)
                        for p in params])
    # slab B: [W2 ; Wo] along rows -> (FFN + H, H) per block
    slab_b = jnp.stack([jnp.concatenate([p["w2"], p["wo"]], axis=0) for p in params])
    vecs = jnp.stack([vec_slab(p) for p in params])
    assert slab_a.shape == (NUM_BLOCKS, HIDDEN, SLAB_A_COLS)
    assert slab_b.shape == (NUM_BLOCKS, SLAB_B_ROWS, HIDDEN)
    assert vecs.shape == (NUM_BLOCKS, 6, FFN)
    return slab_a, slab_b, vecs


# ---------------------------------------- main ------------------------------------------
if __name__ == "__main__":
    key = jax.random.PRNGKey(0)
    k_x, k_p, k_emb, k_rand = jax.random.split(key, 4)

    N = 8  # number of graph nodes
    x = jax.random.normal(k_x, (N, HIDDEN), jnp.float32)

    # deterministic ring graph: edge_index shape (2, N)
    src = jnp.arange(N, dtype=jnp.int32)
    dst = (src + 1) % N
    edge_index = jnp.stack([src, dst])
    num_target_nodes = N  # unused by the reference forward pass

    # nn.Embedding(context_depth+1, 1, padding_idx=0): normal init, row 0 zeroed.
    struct_emb = jax.random.normal(k_emb, (CONTEXT_DEPTH + 1, 1), jnp.float32)
    struct_emb = struct_emb.at[0].set(0.0)

    params = init_params(k_p)
    stacked = stack_params(params)

    bias = structural_encoder_bias(k_rand, edge_index, N, struct_emb)
    out = run_horizontal_transformer(x, bias, stacked)

    jax.block_until_ready(out)
    print("KERNEL_OK")
</pallas_src>

<mosaic_0001>
module attributes {stable_mosaic.version = 11 : i64} {
  func.func @fused_hsgt_kernel(%arg0: memref<8x32xf32, #tpu.memory_space<vmem>>, %arg1: memref<8x8xf32, #tpu.memory_space<vmem>>, %arg2: memref<2x32x160xf32, #tpu.memory_space<vmem>>, %arg3: memref<2x96x32xf32, #tpu.memory_space<vmem>>, %arg4: memref<2x6x64xf32, #tpu.memory_space<vmem>>, %arg5: memref<8x32xf32, #tpu.memory_space<vmem>>) attributes {dimension_semantics = [], scalar_prefetch = 0 : i64, scratch_operands = 0 : i64, tpu.core_type = #tpu.core_type<tc>} {
    %c0 = arith.constant 0 : index
    %c0_0 = arith.constant 0 : index
    %0 = vector.load %arg0[%c0, %c0_0] : memref<8x32xf32, #tpu.memory_space<vmem>>, vector<8x32xf32>
    %c0_1 = arith.constant 0 : index
    %c0_2 = arith.constant 0 : index
    %1 = vector.load %arg1[%c0_1, %c0_2] : memref<8x8xf32, #tpu.memory_space<vmem>>, vector<8x8xf32>
    %c0_3 = arith.constant 0 : index
    %c0_4 = arith.constant 0 : index
    %c0_5 = arith.constant 0 : index
    %2 = vector.load %arg2[%c0_3, %c0_4, %c0_5] : memref<2x32x160xf32, #tpu.memory_space<vmem>>, vector<1x32x160xf32>
    %3 = vector.shape_cast %2 : vector<1x32x160xf32> to vector<32x160xf32>
    %c0_6 = arith.constant 0 : index
    %c0_7 = arith.constant 0 : index
    %c0_8 = arith.constant 0 : index
    %4 = vector.load %arg3[%c0_6, %c0_7, %c0_8] : memref<2x96x32xf32, #tpu.memory_space<vmem>>, vector<1x96x32xf32>
    %5 = vector.shape_cast %4 : vector<1x96x32xf32> to vector<96x32xf32>
    %c0_9 = arith.constant 0 : index
    %c0_10 = arith.constant 0 : index
    %c0_11 = arith.constant 0 : index
    %6 = vector.load %arg4[%c0_9, %c0_10, %c0_11] : memref<2x6x64xf32, #tpu.memory_space<vmem>>, vector<1x6x64xf32>
    %7 = vector.shape_cast %6 : vector<1x6x64xf32> to vector<6x64xf32>
    %8 = vector.extract_strided_slice %3 {offsets = [0, 0], sizes = [32, 96], strides = [1, 1]} : vector<32x160xf32> to vector<32x96xf32>
    %9 = vector.extract_strided_slice %3 {offsets = [0, 96], sizes = [32, 64], strides = [1, 1]} : vector<32x160xf32> to vector<32x64xf32>
    %10 = vector.extract_strided_slice %5 {offsets = [0, 0], sizes = [64, 32], strides = [1, 1]} : vector<96x32xf32> to vector<64x32xf32>
    %11 = vector.extract_strided_slice %5 {offsets = [64, 0], sizes = [32, 32], strides = [1, 1]} : vector<96x32xf32> to vector<32x32xf32>
    %12 = vector.extract_strided_slice %7 {offsets = [0, 0], sizes = [1, 64], strides = [1, 1]} : vector<6x64xf32> to vector<1x64xf32>
    %13 = vector.extract_strided_slice %7 {offsets = [1, 0], sizes = [1, 32], strides = [1, 1]} : vector<6x64xf32> to vector<1x32xf32>
    %14 = vector.extract_strided_slice %7 {offsets = [2, 0], sizes = [1, 32], strides = [1, 1]} : vector<6x64xf32> to vector<1x32xf32>
    %15 = vector.extract_strided_slice %7 {offsets = [3, 0], sizes = [1, 32], strides = [1, 1]} : vector<6x64xf32> to vector<1x32xf32>
    %16 = vector.extract_strided_slice %7 {offsets = [4, 0], sizes = [1, 32], strides = [1, 1]} : vector<6x64xf32> to vector<1x32xf32>
    %17 = vector.extract_strided_slice %7 {offsets = [5, 0], sizes = [1, 32], strides = [1, 1]} : vector<6x64xf32> to vector<1x32xf32>
    %cst = arith.constant dense<0.000000e+00> : vector<8x96xf32>
    %18 = tpu.matmul %0, %8, %cst {dimension_numbers = #tpu.dot_dimension_numbers<[1], [0], [0], [1], [0, 0, 1, 1], [], []>} : vector<8x32xf32>, vector<32x96xf32>, vector<8x96xf32> -> vector<8x96xf32>
    %19 = vector.extract_strided_slice %18 {offsets = [0, 0], sizes = [8, 32], strides = [1, 1]} : vector<8x96xf32> to vector<8x32xf32>
    %20 = vector.extract_strided_slice %18 {offsets = [0, 32], sizes = [8, 32], strides = [1, 1]} : vector<8x96xf32> to vector<8x32xf32>
    %21 = vector.extract_strided_slice %18 {offsets = [0, 64], sizes = [8, 32], strides = [1, 1]} : vector<8x96xf32> to vector<8x32xf32>
    %22 = vector.extract_strided_slice %19 {offsets = [0, 0], sizes = [8, 8], strides = [1, 1]} : vector<8x32xf32> to vector<8x8xf32>
    %23 = vector.extract_strided_slice %20 {offsets = [0, 0], sizes = [8, 8], strides = [1, 1]} : vector<8x32xf32> to vector<8x8xf32>
    %24 = vector.extract_strided_slice %21 {offsets = [0, 0], sizes = [8, 8], strides = [1, 1]} : vector<8x32xf32> to vector<8x8xf32>
    %cst_12 = arith.constant dense<0.000000e+00> : vector<8x8xf32>
    %25 = tpu.matmul %22, %23, %cst_12 {dimension_numbers = #tpu.dot_dimension_numbers<[1], [1], [0], [0], [0, 0, 1, 0], [], []>} : vector<8x8xf32>, vector<8x8xf32>, vector<8x8xf32> -> vector<8x8xf32>
    %cst_13 = arith.constant 0.353553385 : f32
    %26 = vector.broadcast %cst_13 : f32 to vector<8x8xf32>
    %27 = arith.mulf %25, %26 : vector<8x8xf32>
    %28 = arith.addf %27, %1 : vector<8x8xf32>
    %cst_14 = arith.constant dense<0xFF800000> : vector<8xf32>
    %29 = vector.multi_reduction <maximumf>, %28, %cst_14 [1] : vector<8x8xf32> to vector<8xf32>
    %30 = vector.shape_cast %29 : vector<8xf32> to vector<8x1xf32>
    %31 = vector.broadcast %30 : vector<8x1xf32> to vector<8x8xf32>
    %32 = arith.subf %28, %31 : vector<8x8xf32>
    %33 = math.exp %32 : vector<8x8xf32>
    %cst_15 = arith.constant dense<0.000000e+00> : vector<8xf32>
    %34 = vector.multi_reduction <add>, %33, %cst_15 [1] : vector<8x8xf32> to vector<8xf32>
    %35 = vector.shape_cast %34 : vector<8xf32> to vector<8x1xf32>
    %36 = tpu.reciprocal %35 {approx = true} : vector<8x1xf32> -> vector<8x1xf32>
    %37 = vector.broadcast %36 : vector<8x1xf32> to vector<8x8xf32>
    %38 = arith.mulf %33, %37 : vector<8x8xf32>
    %cst_16 = arith.constant dense<0.000000e+00> : vector<8x8xf32>
    %39 = tpu.matmul %38, %24, %cst_16 {dimension_numbers = #tpu.dot_dimension_numbers<[1], [0], [0], [1], [0, 0, 1, 1], [], []>} : vector<8x8xf32>, vector<8x8xf32>, vector<8x8xf32> -> vector<8x8xf32>
    %40 = vector.extract_strided_slice %19 {offsets = [0, 8], sizes = [8, 8], strides = [1, 1]} : vector<8x32xf32> to vector<8x8xf32>
    %41 = vector.extract_strided_slice %20 {offsets = [0, 8], sizes = [8, 8], strides = [1, 1]} : vector<8x32xf32> to vector<8x8xf32>
    %42 = vector.extract_strided_slice %21 {offsets = [0, 8], sizes = [8, 8], strides = [1, 1]} : vector<8x32xf32> to vector<8x8xf32>
    %cst_17 = arith.constant dense<0.000000e+00> : vector<8x8xf32>
    %43 = tpu.matmul %40, %41, %cst_17 {dimension_numbers = #tpu.dot_dimension_numbers<[1], [1], [0], [0], [0, 0, 1, 0], [], []>} : vector<8x8xf32>, vector<8x8xf32>, vector<8x8xf32> -> vector<8x8xf32>
    %cst_18 = arith.constant 0.353553385 : f32
    %44 = vector.broadcast %cst_18 : f32 to vector<8x8xf32>
    %45 = arith.mulf %43, %44 : vector<8x8xf32>
    %46 = arith.addf %45, %1 : vector<8x8xf32>
    %cst_19 = arith.constant dense<0xFF800000> : vector<8xf32>
    %47 = vector.multi_reduction <maximumf>, %46, %cst_19 [1] : vector<8x8xf32> to vector<8xf32>
    %48 = vector.shape_cast %47 : vector<8xf32> to vector<8x1xf32>
    %49 = vector.broadcast %48 : vector<8x1xf32> to vector<8x8xf32>
    %50 = arith.subf %46, %49 : vector<8x8xf32>
    %51 = math.exp %50 : vector<8x8xf32>
    %cst_20 = arith.constant dense<0.000000e+00> : vector<8xf32>
    %52 = vector.multi_reduction <add>, %51, %cst_20 [1] : vector<8x8xf32> to vector<8xf32>
    %53 = vector.shape_cast %52 : vector<8xf32> to vector<8x1xf32>
    %54 = tpu.reciprocal %53 {approx = true} : vector<8x1xf32> -> vector<8x1xf32>
    %55 = vector.broadcast %54 : vector<8x1xf32> to vector<8x8xf32>
    %56 = arith.mulf %51, %55 : vector<8x8xf32>
    %cst_21 = arith.constant dense<0.000000e+00> : vector<8x8xf32>
    %57 = tpu.matmul %56, %42, %cst_21 {dimension_numbers = #tpu.dot_dimension_numbers<[1], [0], [0], [1], [0, 0, 1, 1], [], []>} : vector<8x8xf32>, vector<8x8xf32>, vector<8x8xf32> -> vector<8x8xf32>
    %58 = vector.extract_strided_slice %19 {offsets = [0, 16], sizes = [8, 8], strides = [1, 1]} : vector<8x32xf32> to vector<8x8xf32>
    %59 = vector.extract_strided_slice %20 {offsets = [0, 16], sizes = [8, 8], strides = [1, 1]} : vector<8x32xf32> to vector<8x8xf32>
    %60 = vector.extract_strided_slice %21 {offsets = [0, 16], sizes = [8, 8], strides = [1, 1]} : vector<8x32xf32> to vector<8x8xf32>
    %cst_22 = arith.constant dense<0.000000e+00> : vector<8x8xf32>
    %61 = tpu.matmul %58, %59, %cst_22 {dimension_numbers = #tpu.dot_dimension_numbers<[1], [1], [0], [0], [0, 0, 1, 0], [], []>} : vector<8x8xf32>, vector<8x8xf32>, vector<8x8xf32> -> vector<8x8xf32>
    %cst_23 = arith.constant 0.353553385 : f32
    %62 = vector.broadcast %cst_23 : f32 to vector<8x8xf32>
    %63 = arith.mulf %61, %62 : vector<8x8xf32>
    %64 = arith.addf %63, %1 : vector<8x8xf32>
    %cst_24 = arith.constant dense<0xFF800000> : vector<8xf32>
    %65 = vector.multi_reduction <maximumf>, %64, %cst_24 [1] : vector<8x8xf32> to vector<8xf32>
    %66 = vector.shape_cast %65 : vector<8xf32> to vector<8x1xf32>
    %67 = vector.broadcast %66 : vector<8x1xf32> to vector<8x8xf32>
    %68 = arith.subf %64, %67 : vector<8x8xf32>
    %69 = math.exp %68 : vector<8x8xf32>
    %cst_25 = arith.constant dense<0.000000e+00> : vector<8xf32>
    %70 = vector.multi_reduction <add>, %69, %cst_25 [1] : vector<8x8xf32> to vector<8xf32>
    %71 = vector.shape_cast %70 : vector<8xf32> to vector<8x1xf32>
    %72 = tpu.reciprocal %71 {approx = true} : vector<8x1xf32> -> vector<8x1xf32>
    %73 = vector.broadcast %72 : vector<8x1xf32> to vector<8x8xf32>
    %74 = arith.mulf %69, %73 : vector<8x8xf32>
    %cst_26 = arith.constant dense<0.000000e+00> : vector<8x8xf32>
    %75 = tpu.matmul %74, %60, %cst_26 {dimension_numbers = #tpu.dot_dimension_numbers<[1], [0], [0], [1], [0, 0, 1, 1], [], []>} : vector<8x8xf32>, vector<8x8xf32>, vector<8x8xf32> -> vector<8x8xf32>
    %76 = vector.extract_strided_slice %19 {offsets = [0, 24], sizes = [8, 8], strides = [1, 1]} : vector<8x32xf32> to vector<8x8xf32>
    %77 = vector.extract_strided_slice %20 {offsets = [0, 24], sizes = [8, 8], strides = [1, 1]} : vector<8x32xf32> to vector<8x8xf32>
    %78 = vector.extract_strided_slice %21 {offsets = [0, 24], sizes = [8, 8], strides = [1, 1]} : vector<8x32xf32> to vector<8x8xf32>
    %cst_27 = arith.constant dense<0.000000e+00> : vector<8x8xf32>
    %79 = tpu.matmul %76, %77, %cst_27 {dimension_numbers = #tpu.dot_dimension_numbers<[1], [1], [0], [0], [0, 0, 1, 0], [], []>} : vector<8x8xf32>, vector<8x8xf32>, vector<8x8xf32> -> vector<8x8xf32>
    %cst_28 = arith.constant 0.353553385 : f32
    %80 = vector.broadcast %cst_28 : f32 to vector<8x8xf32>
    %81 = arith.mulf %79, %80 : vector<8x8xf32>
    %82 = arith.addf %81, %1 : vector<8x8xf32>
    %cst_29 = arith.constant dense<0xFF800000> : vector<8xf32>
    %83 = vector.multi_reduction <maximumf>, %82, %cst_29 [1] : vector<8x8xf32> to vector<8xf32>
    %84 = vector.shape_cast %83 : vector<8xf32> to vector<8x1xf32>
    %85 = vector.broadcast %84 : vector<8x1xf32> to vector<8x8xf32>
    %86 = arith.subf %82, %85 : vector<8x8xf32>
    %87 = math.exp %86 : vector<8x8xf32>
    %cst_30 = arith.constant dense<0.000000e+00> : vector<8xf32>
    %88 = vector.multi_reduction <add>, %87, %cst_30 [1] : vector<8x8xf32> to vector<8xf32>
    %89 = vector.shape_cast %88 : vector<8xf32> to vector<8x1xf32>
    %90 = tpu.reciprocal %89 {approx = true} : vector<8x1xf32> -> vector<8x1xf32>
    %91 = vector.broadcast %90 : vector<8x1xf32> to vector<8x8xf32>
    %92 = arith.mulf %87, %91 : vector<8x8xf32>
    %cst_31 = arith.constant dense<0.000000e+00> : vector<8x8xf32>
    %93 = tpu.matmul %92, %78, %cst_31 {dimension_numbers = #tpu.dot_dimension_numbers<[1], [0], [0], [1], [0, 0, 1, 1], [], []>} : vector<8x8xf32>, vector<8x8xf32>, vector<8x8xf32> -> vector<8x8xf32>
    %94 = tpu.concatenate %39, %57, %75, %93 in 1 : vector<8x8xf32>, vector<8x8xf32>, vector<8x8xf32>, vector<8x8xf32> -> vector<8x32xf32>
    %cst_32 = arith.constant dense<0.000000e+00> : vector<8x32xf32>
    %95 = tpu.matmul %94, %11, %cst_32 {dimension_numbers = #tpu.dot_dimension_numbers<[1], [0], [0], [1], [0, 0, 1, 1], [], []>} : vector<8x32xf32>, vector<32x32xf32>, vector<8x32xf32> -> vector<8x32xf32>
    %96 = arith.addf %0, %95 : vector<8x32xf32>
    %cst_33 = arith.constant dense<0.000000e+00> : vector<8xf32>
    %97 = vector.multi_reduction <add>, %96, %cst_33 [1] : vector<8x32xf32> to vector<8xf32>
    %98 = vector.shape_cast %97 : vector<8xf32> to vector<8x1xf32>
    %cst_34 = arith.constant 3.200000e+01 : f32
    %99 = vector.broadcast %cst_34 : f32 to vector<8x1xf32>
    %100 = arith.divf %98, %99 : vector<8x1xf32>
    %101 = vector.broadcast %100 : vector<8x1xf32> to vector<8x32xf32>
    %102 = arith.subf %96, %101 : vector<8x32xf32>
    %103 = arith.mulf %102, %102 : vector<8x32xf32>
    %cst_35 = arith.constant dense<0.000000e+00> : vector<8xf32>
    %104 = vector.multi_reduction <add>, %103, %cst_35 [1] : vector<8x32xf32> to vector<8xf32>
    %105 = vector.shape_cast %104 : vector<8xf32> to vector<8x1xf32>
    %cst_36 = arith.constant 3.200000e+01 : f32
    %106 = vector.broadcast %cst_36 : f32 to vector<8x1xf32>
    %107 = arith.divf %105, %106 : vector<8x1xf32>
    %108 = vector.broadcast %100 : vector<8x1xf32> to vector<8x32xf32>
    %109 = arith.subf %96, %108 : vector<8x32xf32>
    %cst_37 = arith.constant 9.99999974E-6 : f32
    %110 = vector.broadcast %cst_37 : f32 to vector<8x1xf32>
    %111 = arith.addf %107, %110 : vector<8x1xf32>
    %112 = math.rsqrt %111 : vector<8x1xf32>
    %113 = vector.broadcast %112 : vector<8x1xf32> to vector<8x32xf32>
    %114 = arith.mulf %109, %113 : vector<8x32xf32>
    %115 = vector.broadcast %14 : vector<1x32xf32> to vector<8x32xf32>
    %116 = arith.mulf %114, %115 : vector<8x32xf32>
    %117 = vector.broadcast %15 : vector<1x32xf32> to vector<8x32xf32>
    %118 = arith.addf %116, %117 : vector<8x32xf32>
    %cst_38 = arith.constant dense<0.000000e+00> : vector<8x64xf32>
    %119 = tpu.matmul %118, %9, %cst_38 {dimension_numbers = #tpu.dot_dimension_numbers<[1], [0], [0], [1], [0, 0, 1, 1], [], []>} : vector<8x32xf32>, vector<32x64xf32>, vector<8x64xf32> -> vector<8x64xf32>
    %120 = vector.broadcast %12 : vector<1x64xf32> to vector<8x64xf32>
    %121 = arith.addf %119, %120 : vector<8x64xf32>
    %cst_39 = arith.constant 5.000000e-01 : f32
    %122 = vector.broadcast %cst_39 : f32 to vector<8x64xf32>
    %123 = arith.mulf %122, %121 : vector<8x64xf32>
    %cst_40 = arith.constant 0.707106769 : f32
    %124 = vector.broadcast %cst_40 : f32 to vector<8x64xf32>
    %125 = arith.mulf %121, %124 : vector<8x64xf32>
    %cst_41 = arith.constant 0.000000e+00 : f32
    %126 = vector.broadcast %cst_41 : f32 to vector<8x64xf32>
    %127 = arith.cmpf oge, %125, %126 : vector<8x64xf32>
    %cst_42 = arith.constant 1.000000e+00 : f32
    %cst_43 = arith.constant -1.000000e+00 : f32
    %128 = vector.broadcast %cst_42 : f32 to vector<8x64xf32>
    %129 = vector.broadcast %cst_43 : f32 to vector<8x64xf32>
    %130 = arith.select %127, %128, %129 : vector<8x64xi1>, vector<8x64xf32>
    %131 = math.absf %125 : vector<8x64xf32>
    %cst_44 = arith.constant 0.327591091 : f32
    %132 = vector.broadcast %cst_44 : f32 to vector<8x64xf32>
    %133 = arith.mulf %132, %131 : vector<8x64xf32>
    %cst_45 = arith.constant 1.000000e+00 : f32
    %134 = vector.broadcast %cst_45 : f32 to vector<8x64xf32>
    %135 = arith.addf %134, %133 : vector<8x64xf32>
    %136 = tpu.reciprocal %135 {approx = true} : vector<8x64xf32> -> vector<8x64xf32>
    %cst_46 = arith.constant 1.06140542 : f32
    %137 = vector.broadcast %cst_46 : f32 to vector<8x64xf32>
    %138 = arith.mulf %136, %137 : vector<8x64xf32>
    %cst_47 = arith.constant -1.45315206 : f32
    %139 = vector.broadcast %cst_47 : f32 to vector<8x64xf32>
    %140 = arith.addf %139, %138 : vector<8x64xf32>
    %141 = arith.mulf %136, %140 : vector<8x64xf32>
    %cst_48 = arith.constant 1.42141378 : f32
    %142 = vector.broadcast %cst_48 : f32 to vector<8x64xf32>
    %143 = arith.addf %142, %141 : vector<8x64xf32>
    %144 = arith.mulf %136, %143 : vector<8x64xf32>
    %cst_49 = arith.constant -0.284496725 : f32
    %145 = vector.broadcast %cst_49 : f32 to vector<8x64xf32>
    %146 = arith.addf %145, %144 : vector<8x64xf32>
    %147 = arith.mulf %136, %146 : vector<8x64xf32>
    %cst_50 = arith.constant 0.254829586 : f32
    %148 = vector.broadcast %cst_50 : f32 to vector<8x64xf32>
    %149 = arith.addf %148, %147 : vector<8x64xf32>
    %150 = arith.mulf %136, %149 : vector<8x64xf32>
    %cst_51 = arith.constant 0.000000e+00 : f32
    %151 = vector.broadcast %cst_51 : f32 to vector<8x64xf32>
    %152 = arith.subf %151, %131 : vector<8x64xf32>
    %153 = arith.mulf %152, %131 : vector<8x64xf32>
    %154 = math.exp %153 : vector<8x64xf32>
    %155 = arith.mulf %150, %154 : vector<8x64xf32>
    %cst_52 = arith.constant 1.000000e+00 : f32
    %156 = vector.broadcast %cst_52 : f32 to vector<8x64xf32>
    %157 = arith.subf %156, %155 : vector<8x64xf32>
    %158 = arith.mulf %130, %157 : vector<8x64xf32>
    %cst_53 = arith.constant 1.000000e+00 : f32
    %159 = vector.broadcast %cst_53 : f32 to vector<8x64xf32>
    %160 = arith.addf %159, %158 : vector<8x64xf32>
    %161 = arith.mulf %123, %160 : vector<8x64xf32>
    %cst_54 = arith.constant dense<0.000000e+00> : vector<8x32xf32>
    %162 = tpu.matmul %161, %10, %cst_54 {dimension_numbers = #tpu.dot_dimension_numbers<[1], [0], [0], [1], [0, 0, 1, 1], [], []>} : vector<8x64xf32>, vector<64x32xf32>, vector<8x32xf32> -> vector<8x32xf32>
    %163 = vector.broadcast %13 : vector<1x32xf32> to vector<8x32xf32>
    %164 = arith.addf %162, %163 : vector<8x32xf32>
    %165 = arith.addf %96, %164 : vector<8x32xf32>
    %cst_55 = arith.constant dense<0.000000e+00> : vector<8xf32>
    %166 = vector.multi_reduction <add>, %165, %cst_55 [1] : vector<8x32xf32> to vector<8xf32>
    %167 = vector.shape_cast %166 : vector<8xf32> to vector<8x1xf32>
    %cst_56 = arith.constant 3.200000e+01 : f32
    %168 = vector.broadcast %cst_56 : f32 to vector<8x1xf32>
    %169 = arith.divf %167, %168 : vector<8x1xf32>
    %170 = vector.broadcast %169 : vector<8x1xf32> to vector<8x32xf32>
    %171 = arith.subf %165, %170 : vector<8x32xf32>
    %172 = arith.mulf %171, %171 : vector<8x32xf32>
    %cst_57 = arith.constant dense<0.000000e+00> : vector<8xf32>
    %173 = vector.multi_reduction <add>, %172, %cst_57 [1] : vector<8x32xf32> to vector<8xf32>
    %174 = vector.shape_cast %173 : vector<8xf32> to vector<8x1xf32>
    %cst_58 = arith.constant 3.200000e+01 : f32
    %175 = vector.broadcast %cst_58 : f32 to vector<8x1xf32>
    %176 = arith.divf %174, %175 : vector<8x1xf32>
    %177 = vector.broadcast %169 : vector<8x1xf32> to vector<8x32xf32>
    %178 = arith.subf %165, %177 : vector<8x32xf32>
    %cst_59 = arith.constant 9.99999974E-6 : f32
    %179 = vector.broadcast %cst_59 : f32 to vector<8x1xf32>
    %180 = arith.addf %176, %179 : vector<8x1xf32>
    %181 = math.rsqrt %180 : vector<8x1xf32>
    %182 = vector.broadcast %181 : vector<8x1xf32> to vector<8x32xf32>
    %183 = arith.mulf %178, %182 : vector<8x32xf32>
    %184 = vector.broadcast %16 : vector<1x32xf32> to vector<8x32xf32>
    %185 = arith.mulf %183, %184 : vector<8x32xf32>
    %186 = vector.broadcast %17 : vector<1x32xf32> to vector<8x32xf32>
    %187 = arith.addf %185, %186 : vector<8x32xf32>
    %c1 = arith.constant 1 : index
    %c0_60 = arith.constant 0 : index
    %c0_61 = arith.constant 0 : index
    %188 = vector.load %arg2[%c1, %c0_60, %c0_61] : memref<2x32x160xf32, #tpu.memory_space<vmem>>, vector<1x32x160xf32>
    %189 = vector.shape_cast %188 : vector<1x32x160xf32> to vector<32x160xf32>
    %c1_62 = arith.constant 1 : index
    %c0_63 = arith.constant 0 : index
    %c0_64 = arith.constant 0 : index
    %190 = vector.load %arg3[%c1_62, %c0_63, %c0_64] : memref<2x96x32xf32, #tpu.memory_space<vmem>>, vector<1x96x32xf32>
    %191 = vector.shape_cast %190 : vector<1x96x32xf32> to vector<96x32xf32>
    %c1_65 = arith.constant 1 : index
    %c0_66 = arith.constant 0 : index
    %c0_67 = arith.constant 0 : index
    %192 = vector.load %arg4[%c1_65, %c0_66, %c0_67] : memref<2x6x64xf32, #tpu.memory_space<vmem>>, vector<1x6x64xf32>
    %193 = vector.shape_cast %192 : vector<1x6x64xf32> to vector<6x64xf32>
    %194 = vector.extract_strided_slice %189 {offsets = [0, 0], sizes = [32, 96], strides = [1, 1]} : vector<32x160xf32> to vector<32x96xf32>
    %195 = vector.extract_strided_slice %189 {offsets = [0, 96], sizes = [32, 64], strides = [1, 1]} : vector<32x160xf32> to vector<32x64xf32>
    %196 = vector.extract_strided_slice %191 {offsets = [0, 0], sizes = [64, 32], strides = [1, 1]} : vector<96x32xf32> to vector<64x32xf32>
    %197 = vector.extract_strided_slice %191 {offsets = [64, 0], sizes = [32, 32], strides = [1, 1]} : vector<96x32xf32> to vector<32x32xf32>
    %198 = vector.extract_strided_slice %193 {offsets = [0, 0], sizes = [1, 64], strides = [1, 1]} : vector<6x64xf32> to vector<1x64xf32>
    %199 = vector.extract_strided_slice %193 {offsets = [1, 0], sizes = [1, 32], strides = [1, 1]} : vector<6x64xf32> to vector<1x32xf32>
    %200 = vector.extract_strided_slice %193 {offsets = [2, 0], sizes = [1, 32], strides = [1, 1]} : vector<6x64xf32> to vector<1x32xf32>
    %201 = vector.extract_strided_slice %193 {offsets = [3, 0], sizes = [1, 32], strides = [1, 1]} : vector<6x64xf32> to vector<1x32xf32>
    %202 = vector.extract_strided_slice %193 {offsets = [4, 0], sizes = [1, 32], strides = [1, 1]} : vector<6x64xf32> to vector<1x32xf32>
    %203 = vector.extract_strided_slice %193 {offsets = [5, 0], sizes = [1, 32], strides = [1, 1]} : vector<6x64xf32> to vector<1x32xf32>
    %cst_68 = arith.constant dense<0.000000e+00> : vector<8x96xf32>
    %204 = tpu.matmul %187, %194, %cst_68 {dimension_numbers = #tpu.dot_dimension_numbers<[1], [0], [0], [1], [0, 0, 1, 1], [], []>} : vector<8x32xf32>, vector<32x96xf32>, vector<8x96xf32> -> vector<8x96xf32>
    %205 = vector.extract_strided_slice %204 {offsets = [0, 0], sizes = [8, 32], strides = [1, 1]} : vector<8x96xf32> to vector<8x32xf32>
    %206 = vector.extract_strided_slice %204 {offsets = [0, 32], sizes = [8, 32], strides = [1, 1]} : vector<8x96xf32> to vector<8x32xf32>
    %207 = vector.extract_strided_slice %204 {offsets = [0, 64], sizes = [8, 32], strides = [1, 1]} : vector<8x96xf32> to vector<8x32xf32>
    %208 = vector.extract_strided_slice %205 {offsets = [0, 0], sizes = [8, 8], strides = [1, 1]} : vector<8x32xf32> to vector<8x8xf32>
    %209 = vector.extract_strided_slice %206 {offsets = [0, 0], sizes = [8, 8], strides = [1, 1]} : vector<8x32xf32> to vector<8x8xf32>
    %210 = vector.extract_strided_slice %207 {offsets = [0, 0], sizes = [8, 8], strides = [1, 1]} : vector<8x32xf32> to vector<8x8xf32>
    %cst_69 = arith.constant dense<0.000000e+00> : vector<8x8xf32>
    %211 = tpu.matmul %208, %209, %cst_69 {dimension_numbers = #tpu.dot_dimension_numbers<[1], [1], [0], [0], [0, 0, 1, 0], [], []>} : vector<8x8xf32>, vector<8x8xf32>, vector<8x8xf32> -> vector<8x8xf32>
    %cst_70 = arith.constant 0.353553385 : f32
    %212 = vector.broadcast %cst_70 : f32 to vector<8x8xf32>
    %213 = arith.mulf %211, %212 : vector<8x8xf32>
    %214 = arith.addf %213, %1 : vector<8x8xf32>
    %cst_71 = arith.constant dense<0xFF800000> : vector<8xf32>
    %215 = vector.multi_reduction <maximumf>, %214, %cst_71 [1] : vector<8x8xf32> to vector<8xf32>
    %216 = vector.shape_cast %215 : vector<8xf32> to vector<8x1xf32>
    %217 = vector.broadcast %216 : vector<8x1xf32> to vector<8x8xf32>
    %218 = arith.subf %214, %217 : vector<8x8xf32>
    %219 = math.exp %218 : vector<8x8xf32>
    %cst_72 = arith.constant dense<0.000000e+00> : vector<8xf32>
    %220 = vector.multi_reduction <add>, %219, %cst_72 [1] : vector<8x8xf32> to vector<8xf32>
    %221 = vector.shape_cast %220 : vector<8xf32> to vector<8x1xf32>
    %222 = tpu.reciprocal %221 {approx = true} : vector<8x1xf32> -> vector<8x1xf32>
    %223 = vector.broadcast %222 : vector<8x1xf32> to vector<8x8xf32>
    %224 = arith.mulf %219, %223 : vector<8x8xf32>
    %cst_73 = arith.constant dense<0.000000e+00> : vector<8x8xf32>
    %225 = tpu.matmul %224, %210, %cst_73 {dimension_numbers = #tpu.dot_dimension_numbers<[1], [0], [0], [1], [0, 0, 1, 1], [], []>} : vector<8x8xf32>, vector<8x8xf32>, vector<8x8xf32> -> vector<8x8xf32>
    %226 = vector.extract_strided_slice %205 {offsets = [0, 8], sizes = [8, 8], strides = [1, 1]} : vector<8x32xf32> to vector<8x8xf32>
    %227 = vector.extract_strided_slice %206 {offsets = [0, 8], sizes = [8, 8], strides = [1, 1]} : vector<8x32xf32> to vector<8x8xf32>
    %228 = vector.extract_strided_slice %207 {offsets = [0, 8], sizes = [8, 8], strides = [1, 1]} : vector<8x32xf32> to vector<8x8xf32>
    %cst_74 = arith.constant dense<0.000000e+00> : vector<8x8xf32>
    %229 = tpu.matmul %226, %227, %cst_74 {dimension_numbers = #tpu.dot_dimension_numbers<[1], [1], [0], [0], [0, 0, 1, 0], [], []>} : vector<8x8xf32>, vector<8x8xf32>, vector<8x8xf32> -> vector<8x8xf32>
    %cst_75 = arith.constant 0.353553385 : f32
    %230 = vector.broadcast %cst_75 : f32 to vector<8x8xf32>
    %231 = arith.mulf %229, %230 : vector<8x8xf32>
    %232 = arith.addf %231, %1 : vector<8x8xf32>
    %cst_76 = arith.constant dense<0xFF800000> : vector<8xf32>
    %233 = vector.multi_reduction <maximumf>, %232, %cst_76 [1] : vector<8x8xf32> to vector<8xf32>
    %234 = vector.shape_cast %233 : vector<8xf32> to vector<8x1xf32>
    %235 = vector.broadcast %234 : vector<8x1xf32> to vector<8x8xf32>
    %236 = arith.subf %232, %235 : vector<8x8xf32>
    %237 = math.exp %236 : vector<8x8xf32>
    %cst_77 = arith.constant dense<0.000000e+00> : vector<8xf32>
    %238 = vector.multi_reduction <add>, %237, %cst_77 [1] : vector<8x8xf32> to vector<8xf32>
    %239 = vector.shape_cast %238 : vector<8xf32> to vector<8x1xf32>
    %240 = tpu.reciprocal %239 {approx = true} : vector<8x1xf32> -> vector<8x1xf32>
    %241 = vector.broadcast %240 : vector<8x1xf32> to vector<8x8xf32>
    %242 = arith.mulf %237, %241 : vector<8x8xf32>
    %cst_78 = arith.constant dense<0.000000e+00> : vector<8x8xf32>
    %243 = tpu.matmul %242, %228, %cst_78 {dimension_numbers = #tpu.dot_dimension_numbers<[1], [0], [0], [1], [0, 0, 1, 1], [], []>} : vector<8x8xf32>, vector<8x8xf32>, vector<8x8xf32> -> vector<8x8xf32>
    %244 = vector.extract_strided_slice %205 {offsets = [0, 16], sizes = [8, 8], strides = [1, 1]} : vector<8x32xf32> to vector<8x8xf32>
    %245 = vector.extract_strided_slice %206 {offsets = [0, 16], sizes = [8, 8], strides = [1, 1]} : vector<8x32xf32> to vector<8x8xf32>
    %246 = vector.extract_strided_slice %207 {offsets = [0, 16], sizes = [8, 8], strides = [1, 1]} : vector<8x32xf32> to vector<8x8xf32>
    %cst_79 = arith.constant dense<0.000000e+00> : vector<8x8xf32>
    %247 = tpu.matmul %244, %245, %cst_79 {dimension_numbers = #tpu.dot_dimension_numbers<[1], [1], [0], [0], [0, 0, 1, 0], [], []>} : vector<8x8xf32>, vector<8x8xf32>, vector<8x8xf32> -> vector<8x8xf32>
    %cst_80 = arith.constant 0.353553385 : f32
    %248 = vector.broadcast %cst_80 : f32 to vector<8x8xf32>
    %249 = arith.mulf %247, %248 : vector<8x8xf32>
    %250 = arith.addf %249, %1 : vector<8x8xf32>
    %cst_81 = arith.constant dense<0xFF800000> : vector<8xf32>
    %251 = vector.multi_reduction <maximumf>, %250, %cst_81 [1] : vector<8x8xf32> to vector<8xf32>
    %252 = vector.shape_cast %251 : vector<8xf32> to vector<8x1xf32>
    %253 = vector.broadcast %252 : vector<8x1xf32> to vector<8x8xf32>
    %254 = arith.subf %250, %253 : vector<8x8xf32>
    %255 = math.exp %254 : vector<8x8xf32>
    %cst_82 = arith.constant dense<0.000000e+00> : vector<8xf32>
    %256 = vector.multi_reduction <add>, %255, %cst_82 [1] : vector<8x8xf32> to vector<8xf32>
    %257 = vector.shape_cast %256 : vector<8xf32> to vector<8x1xf32>
    %258 = tpu.reciprocal %257 {approx = true} : vector<8x1xf32> -> vector<8x1xf32>
    %259 = vector.broadcast %258 : vector<8x1xf32> to vector<8x8xf32>
    %260 = arith.mulf %255, %259 : vector<8x8xf32>
    %cst_83 = arith.constant dense<0.000000e+00> : vector<8x8xf32>
    %261 = tpu.matmul %260, %246, %cst_83 {dimension_numbers = #tpu.dot_dimension_numbers<[1], [0], [0], [1], [0, 0, 1, 1], [], []>} : vector<8x8xf32>, vector<8x8xf32>, vector<8x8xf32> -> vector<8x8xf32>
    %262 = vector.extract_strided_slice %205 {offsets = [0, 24], sizes = [8, 8], strides = [1, 1]} : vector<8x32xf32> to vector<8x8xf32>
    %263 = vector.extract_strided_slice %206 {offsets = [0, 24], sizes = [8, 8], strides = [1, 1]} : vector<8x32xf32> to vector<8x8xf32>
    %264 = vector.extract_strided_slice %207 {offsets = [0, 24], sizes = [8, 8], strides = [1, 1]} : vector<8x32xf32> to vector<8x8xf32>
    %cst_84 = arith.constant dense<0.000000e+00> : vector<8x8xf32>
    %265 = tpu.matmul %262, %263, %cst_84 {dimension_numbers = #tpu.dot_dimension_numbers<[1], [1], [0], [0], [0, 0, 1, 0], [], []>} : vector<8x8xf32>, vector<8x8xf32>, vector<8x8xf32> -> vector<8x8xf32>
    %cst_85 = arith.constant 0.353553385 : f32
    %266 = vector.broadcast %cst_85 : f32 to vector<8x8xf32>
    %267 = arith.mulf %265, %266 : vector<8x8xf32>
    %268 = arith.addf %267, %1 : vector<8x8xf32>
    %cst_86 = arith.constant dense<0xFF800000> : vector<8xf32>
    %269 = vector.multi_reduction <maximumf>, %268, %cst_86 [1] : vector<8x8xf32> to vector<8xf32>
    %270 = vector.shape_cast %269 : vector<8xf32> to vector<8x1xf32>
    %271 = vector.broadcast %270 : vector<8x1xf32> to vector<8x8xf32>
    %272 = arith.subf %268, %271 : vector<8x8xf32>
    %273 = math.exp %272 : vector<8x8xf32>
    %cst_87 = arith.constant dense<0.000000e+00> : vector<8xf32>
    %274 = vector.multi_reduction <add>, %273, %cst_87 [1] : vector<8x8xf32> to vector<8xf32>
    %275 = vector.shape_cast %274 : vector<8xf32> to vector<8x1xf32>
    %276 = tpu.reciprocal %275 {approx = true} : vector<8x1xf32> -> vector<8x1xf32>
    %277 = vector.broadcast %276 : vector<8x1xf32> to vector<8x8xf32>
    %278 = arith.mulf %273, %277 : vector<8x8xf32>
    %cst_88 = arith.constant dense<0.000000e+00> : vector<8x8xf32>
    %279 = tpu.matmul %278, %264, %cst_88 {dimension_numbers = #tpu.dot_dimension_numbers<[1], [0], [0], [1], [0, 0, 1, 1], [], []>} : vector<8x8xf32>, vector<8x8xf32>, vector<8x8xf32> -> vector<8x8xf32>
    %280 = tpu.concatenate %225, %243, %261, %279 in 1 : vector<8x8xf32>, vector<8x8xf32>, vector<8x8xf32>, vector<8x8xf32> -> vector<8x32xf32>
    %cst_89 = arith.constant dense<0.000000e+00> : vector<8x32xf32>
    %281 = tpu.matmul %280, %197, %cst_89 {dimension_numbers = #tpu.dot_dimension_numbers<[1], [0], [0], [1], [0, 0, 1, 1], [], []>} : vector<8x32xf32>, vector<32x32xf32>, vector<8x32xf32> -> vector<8x32xf32>
    %282 = arith.addf %187, %281 : vector<8x32xf32>
    %cst_90 = arith.constant dense<0.000000e+00> : vector<8xf32>
    %283 = vector.multi_reduction <add>, %282, %cst_90 [1] : vector<8x32xf32> to vector<8xf32>
    %284 = vector.shape_cast %283 : vector<8xf32> to vector<8x1xf32>
    %cst_91 = arith.constant 3.200000e+01 : f32
    %285 = vector.broadcast %cst_91 : f32 to vector<8x1xf32>
    %286 = arith.divf %284, %285 : vector<8x1xf32>
    %287 = vector.broadcast %286 : vector<8x1xf32> to vector<8x32xf32>
    %288 = arith.subf %282, %287 : vector<8x32xf32>
    %289 = arith.mulf %288, %288 : vector<8x32xf32>
    %cst_92 = arith.constant dense<0.000000e+00> : vector<8xf32>
    %290 = vector.multi_reduction <add>, %289, %cst_92 [1] : vector<8x32xf32> to vector<8xf32>
    %291 = vector.shape_cast %290 : vector<8xf32> to vector<8x1xf32>
    %cst_93 = arith.constant 3.200000e+01 : f32
    %292 = vector.broadcast %cst_93 : f32 to vector<8x1xf32>
    %293 = arith.divf %291, %292 : vector<8x1xf32>
    %294 = vector.broadcast %286 : vector<8x1xf32> to vector<8x32xf32>
    %295 = arith.subf %282, %294 : vector<8x32xf32>
    %cst_94 = arith.constant 9.99999974E-6 : f32
    %296 = vector.broadcast %cst_94 : f32 to vector<8x1xf32>
    %297 = arith.addf %293, %296 : vector<8x1xf32>
    %298 = math.rsqrt %297 : vector<8x1xf32>
    %299 = vector.broadcast %298 : vector<8x1xf32> to vector<8x32xf32>
    %300 = arith.mulf %295, %299 : vector<8x32xf32>
    %301 = vector.broadcast %200 : vector<1x32xf32> to vector<8x32xf32>
    %302 = arith.mulf %300, %301 : vector<8x32xf32>
    %303 = vector.broadcast %201 : vector<1x32xf32> to vector<8x32xf32>
    %304 = arith.addf %302, %303 : vector<8x32xf32>
    %cst_95 = arith.constant dense<0.000000e+00> : vector<8x64xf32>
    %305 = tpu.matmul %304, %195, %cst_95 {dimension_numbers = #tpu.dot_dimension_numbers<[1], [0], [0], [1], [0, 0, 1, 1], [], []>} : vector<8x32xf32>, vector<32x64xf32>, vector<8x64xf32> -> vector<8x64xf32>
    %306 = vector.broadcast %198 : vector<1x64xf32> to vector<8x64xf32>
    %307 = arith.addf %305, %306 : vector<8x64xf32>
    %cst_96 = arith.constant 5.000000e-01 : f32
    %308 = vector.broadcast %cst_96 : f32 to vector<8x64xf32>
    %309 = arith.mulf %308, %307 : vector<8x64xf32>
    %cst_97 = arith.constant 0.707106769 : f32
    %310 = vector.broadcast %cst_97 : f32 to vector<8x64xf32>
    %311 = arith.mulf %307, %310 : vector<8x64xf32>
    %cst_98 = arith.constant 0.000000e+00 : f32
    %312 = vector.broadcast %cst_98 : f32 to vector<8x64xf32>
    %313 = arith.cmpf oge, %311, %312 : vector<8x64xf32>
    %cst_99 = arith.constant 1.000000e+00 : f32
    %cst_100 = arith.constant -1.000000e+00 : f32
    %314 = vector.broadcast %cst_99 : f32 to vector<8x64xf32>
    %315 = vector.broadcast %cst_100 : f32 to vector<8x64xf32>
    %316 = arith.select %313, %314, %315 : vector<8x64xi1>, vector<8x64xf32>
    %317 = math.absf %311 : vector<8x64xf32>
    %cst_101 = arith.constant 0.327591091 : f32
    %318 = vector.broadcast %cst_101 : f32 to vector<8x64xf32>
    %319 = arith.mulf %318, %317 : vector<8x64xf32>
    %cst_102 = arith.constant 1.000000e+00 : f32
    %320 = vector.broadcast %cst_102 : f32 to vector<8x64xf32>
    %321 = arith.addf %320, %319 : vector<8x64xf32>
    %322 = tpu.reciprocal %321 {approx = true} : vector<8x64xf32> -> vector<8x64xf32>
    %cst_103 = arith.constant 1.06140542 : f32
    %323 = vector.broadcast %cst_103 : f32 to vector<8x64xf32>
    %324 = arith.mulf %322, %323 : vector<8x64xf32>
    %cst_104 = arith.constant -1.45315206 : f32
    %325 = vector.broadcast %cst_104 : f32 to vector<8x64xf32>
    %326 = arith.addf %325, %324 : vector<8x64xf32>
    %327 = arith.mulf %322, %326 : vector<8x64xf32>
    %cst_105 = arith.constant 1.42141378 : f32
    %328 = vector.broadcast %cst_105 : f32 to vector<8x64xf32>
    %329 = arith.addf %328, %327 : vector<8x64xf32>
    %330 = arith.mulf %322, %329 : vector<8x64xf32>
    %cst_106 = arith.constant -0.284496725 : f32
    %331 = vector.broadcast %cst_106 : f32 to vector<8x64xf32>
    %332 = arith.addf %331, %330 : vector<8x64xf32>
    %333 = arith.mulf %322, %332 : vector<8x64xf32>
    %cst_107 = arith.constant 0.254829586 : f32
    %334 = vector.broadcast %cst_107 : f32 to vector<8x64xf32>
    %335 = arith.addf %334, %333 : vector<8x64xf32>
    %336 = arith.mulf %322, %335 : vector<8x64xf32>
    %cst_108 = arith.constant 0.000000e+00 : f32
    %337 = vector.broadcast %cst_108 : f32 to vector<8x64xf32>
    %338 = arith.subf %337, %317 : vector<8x64xf32>
    %339 = arith.mulf %338, %317 : vector<8x64xf32>
    %340 = math.exp %339 : vector<8x64xf32>
    %341 = arith.mulf %336, %340 : vector<8x64xf32>
    %cst_109 = arith.constant 1.000000e+00 : f32
    %342 = vector.broadcast %cst_109 : f32 to vector<8x64xf32>
    %343 = arith.subf %342, %341 : vector<8x64xf32>
    %344 = arith.mulf %316, %343 : vector<8x64xf32>
    %cst_110 = arith.constant 1.000000e+00 : f32
    %345 = vector.broadcast %cst_110 : f32 to vector<8x64xf32>
    %346 = arith.addf %345, %344 : vector<8x64xf32>
    %347 = arith.mulf %309, %346 : vector<8x64xf32>
    %cst_111 = arith.constant dense<0.000000e+00> : vector<8x32xf32>
    %348 = tpu.matmul %347, %196, %cst_111 {dimension_numbers = #tpu.dot_dimension_numbers<[1], [0], [0], [1], [0, 0, 1, 1], [], []>} : vector<8x64xf32>, vector<64x32xf32>, vector<8x32xf32> -> vector<8x32xf32>
    %349 = vector.broadcast %199 : vector<1x32xf32> to vector<8x32xf32>
    %350 = arith.addf %348, %349 : vector<8x32xf32>
    %351 = arith.addf %282, %350 : vector<8x32xf32>
    %cst_112 = arith.constant dense<0.000000e+00> : vector<8xf32>
    %352 = vector.multi_reduction <add>, %351, %cst_112 [1] : vector<8x32xf32> to vector<8xf32>
    %353 = vector.shape_cast %352 : vector<8xf32> to vector<8x1xf32>
    %cst_113 = arith.constant 3.200000e+01 : f32
    %354 = vector.broadcast %cst_113 : f32 to vector<8x1xf32>
    %355 = arith.divf %353, %354 : vector<8x1xf32>
    %356 = vector.broadcast %355 : vector<8x1xf32> to vector<8x32xf32>
    %357 = arith.subf %351, %356 : vector<8x32xf32>
    %358 = arith.mulf %357, %357 : vector<8x32xf32>
    %cst_114 = arith.constant dense<0.000000e+00> : vector<8xf32>
    %359 = vector.multi_reduction <add>, %358, %cst_114 [1] : vector<8x32xf32> to vector<8xf32>
    %360 = vector.shape_cast %359 : vector<8xf32> to vector<8x1xf32>
    %cst_115 = arith.constant 3.200000e+01 : f32
    %361 = vector.broadcast %cst_115 : f32 to vector<8x1xf32>
    %362 = arith.divf %360, %361 : vector<8x1xf32>
    %363 = vector.broadcast %355 : vector<8x1xf32> to vector<8x32xf32>
    %364 = arith.subf %351, %363 : vector<8x32xf32>
    %cst_116 = arith.constant 9.99999974E-6 : f32
    %365 = vector.broadcast %cst_116 : f32 to vector<8x1xf32>
    %366 = arith.addf %362, %365 : vector<8x1xf32>
    %367 = math.rsqrt %366 : vector<8x1xf32>
    %368 = vector.broadcast %367 : vector<8x1xf32> to vector<8x32xf32>
    %369 = arith.mulf %364, %368 : vector<8x32xf32>
    %370 = vector.broadcast %202 : vector<1x32xf32> to vector<8x32xf32>
    %371 = arith.mulf %369, %370 : vector<8x32xf32>
    %372 = vector.broadcast %203 : vector<1x32xf32> to vector<8x32xf32>
    %373 = arith.addf %371, %372 : vector<8x32xf32>
    %c0_117 = arith.constant 0 : index
    %c0_118 = arith.constant 0 : index
    %374 = vector.load %arg5[%c0_117, %c0_118] : memref<8x32xf32, #tpu.memory_space<vmem>>, vector<8x32xf32>
    tpu.vector_store %arg5[%c0_117, %c0_118], %373 {strides = array<i32>} : memref<8x32xf32, #tpu.memory_space<vmem>>, vector<8x32xf32>,
    return
  }
}

</mosaic_0001>

<llo_original>
// kernel: tpu_custom_call.1
$region0: #{tpu_custom_call.1}
  #allocation0 [shape = 'u32[]', space=smem, size = 0x4, offset = 0x4, fixed_abs, tag = 'smem constant byte address 0x4 - core index']
  #allocation1 [shape = 'u32[144,128]{1,0:T(1,128)}', space=vmem, size = 0x12000, scoped, tag = 'internal scratch']
  %s0 = inlined_call_operand.vmem [shape: f32[8,32], index: 0, kind: input, shape index: {}]
  %s1 = inlined_call_operand.vmem [shape: f32[8,8], index: 1, kind: input, shape index: {}]
  %s2 = inlined_call_operand.vmem [shape: f32[2,32,160], index: 2, kind: input, shape index: {}]
  %s3 = inlined_call_operand.vmem [shape: f32[2,96,32], index: 3, kind: input, shape index: {}]
  %s4 = inlined_call_operand.vmem [shape: f32[2,6,64], index: 4, kind: input, shape index: {}]
  %s5 = inlined_call_operand.hbm [shape: f32[8,32], index: 5, kind: output, shape index: {}]
  %s6 = sld [smem:[#allocation0]]
  $region30: #{tpu_custom_call.1} parent=0
    _
  %s8 = ssub.s32 1, %s6
  %s9 = scalar_select 0, %s8, %s6
  $region1: #{tpu_custom_call.1} parent=0
    #allocation2 [shape = 'u8[4096]{0}', space=vmem, size = 0x1000, scoped, tag = 'output window, operand 0, single buffered']
    #allocation3 [shape = 's32[1]{0}', space=sflag, size = 0x4, scoped, tag = 'scoped memory for tpu_custom_call.1']
    %10 = vsyncpa [#allocation3], 0
    // Predicated region
    $region2: #{tpu_custom_call.1} parent=1 // pred_check
      _
    $region3: #{tpu_custom_call.1} parent=1 // pred_check_branch
      %12 = sbr.rel (0) target = $region5
    $region4: #{tpu_custom_call.1} parent=1 // pred_region
      _
    $region5: #{tpu_custom_call.1} parent=1 // pred_fallthru
      _
    // Predicated region
    $region6: #{tpu_custom_call.1} parent=1 // pred_check
      _
    $region7: #{tpu_custom_call.1} parent=1 // pred_check_branch
      %14 = sbr.rel (0) target = $region9
    $region8: #{tpu_custom_call.1} parent=1 // pred_region
      _
    $region9: #{tpu_custom_call.1} parent=1 // pred_fallthru
      _
    // Predicated region
    $region10: #{tpu_custom_call.1} parent=1 // pred_check
      _
    $region11: #{tpu_custom_call.1} parent=1 // pred_check_branch
      %16 = sbr.rel (0) target = $region13
    $region12: #{tpu_custom_call.1} parent=1 // pred_region
      _
    $region13: #{tpu_custom_call.1} parent=1 // pred_fallthru
      _
    // Predicated region
    $region14: #{tpu_custom_call.1} parent=1 // pred_check
      _
    $region15: #{tpu_custom_call.1} parent=1 // pred_check_branch
      %18 = sbr.rel (0) target = $region17
    $region16: #{tpu_custom_call.1} parent=1 // pred_region
      _
    $region17: #{tpu_custom_call.1} parent=1 // pred_fallthru
      _
    // Predicated region
    $region18: #{tpu_custom_call.1} parent=1 // pred_check
      _
    $region19: #{tpu_custom_call.1} parent=1 // pred_check_branch
      %20 = sbr.rel (0) target = $region21
    $region20: #{tpu_custom_call.1} parent=1 // pred_region
      _
    $region21: #{tpu_custom_call.1} parent=1 // pred_fallthru
      _
    %v21 = vld [vmem:[%s0] sm:$0xff]
    %v22 = vld [vmem:[%s1] sm:$0xff]
    %v23 = vld [vmem:[%s2] sm:$0xff]
    %v24 = vld [vmem:[%s2 + $0x8] sm:$0xff]
    %v25 = vld [vmem:[%s2 + $0x10] sm:$0xff]
    %v26 = vld [vmem:[%s2 + $0x18] sm:$0xff]
    %v27 = vld [vmem:[%s2 + $0x20] sm:$0xff]
    %v28 = vld [vmem:[%s2 + $0x28] sm:$0xff]
    %v29 = vld [vmem:[%s2 + $0x30] sm:$0xff]
    %v30 = vld [vmem:[%s2 + $0x38] sm:$0xff]
    %v31 = vld [vmem:[%s3] sm:$0xff]
    %v32 = vld [vmem:[%s3 + $0x8] sm:$0xff]
    %v33 = vld [vmem:[%s3 + $0x10] sm:$0xff]
    %v34 = vld [vmem:[%s3 + $0x18] sm:$0xff]
    %v35 = vld [vmem:[%s3 + $0x20] sm:$0xff]
    %v36 = vld [vmem:[%s3 + $0x28] sm:$0xff]
    %v37 = vld [vmem:[%s3 + $0x30] sm:$0xff]
    %v38 = vld [vmem:[%s3 + $0x38] sm:$0xff]
    %v39 = vld [vmem:[%s3 + $0x40] sm:$0xff]
    %v40 = vld [vmem:[%s3 + $0x48] sm:$0xff]
    %v41 = vld [vmem:[%s3 + $0x50] sm:$0xff]
    %v42 = vld [vmem:[%s3 + $0x58] sm:$0xff]
    %v43 = vld [vmem:[%s4] sm:$0x3f]
    %vm44 = vcmask 261120
    %v46 = vsel %vm44, %v21, 0
    %48 = vmatprep.subr.mxu0 0.0
    %49 = vmatpush1.msra.mxu0 0.0
    %50 = vmatprep.subr.mxu0 0.0
    %51 = vmatpush1.msra.mxu0 0.0
    %52 = vmatprep.subr.mxu0 0.0
    %53 = vmatpush1.msra.mxu0 0.0
    %54 = vmatprep.subr.mxu0 0.0
    %55 = vmatpush1.msra.mxu0 0.0
    %56 = vmatprep.subr.mxu0 0.0
    %57 = vmatpush1.msra.mxu0 0.0
    %58 = vmatprep.subr.mxu0 0.0
    %59 = vmatpush1.msra.mxu0 0.0
    %60 = vmatprep.subr.mxu0 0.0
    %61 = vmatpush1.msra.mxu0 0.0
    %62 = vmatprep.subr.mxu0 0.0
    %63 = vmatpush1.msra.mxu0 0.0
    %64 = vmatprep.subr.mxu0 0.0
    %65 = vmatpush1.msra.mxu0 0.0
    %66 = vmatprep.subr.mxu0 0.0
    %67 = vmatpush1.msra.mxu0 0.0
    %68 = vmatprep.subr.mxu0 0.0
    %69 = vmatpush1.msra.mxu0 0.0
    %70 = vmatprep.subr.mxu0 0.0
    %71 = vmatpush1.msra.mxu0 0.0
    %72 = vmatprep.subr.mxu0 0.0
    %73 = vmatpush1.msra.mxu0 %v29
    %74 = vmatprep.subr.mxu0 0.0
    %75 = vmatpush1.msra.mxu0 %v27
    %76 = vmatprep.subr.mxu0 0.0
    %77 = vmatpush1.msra.mxu0 %v25
    %78 = vmatprep.subr.mxu0 0.0
    %79 = vmatpush1.msra.mxu0 %v23
    %80 = vmatprep.subr.mxu0 0.0
    %81 = vmatpush2.msra.mxu0 0.0
    %82 = vmatprep.subr.mxu0 0.0
    %83 = vmatpush2.msra.mxu0 0.0
    %84 = vmatprep.subr.mxu0 0.0
    %85 = vmatpush2.msra.mxu0 0.0
    %86 = vmatprep.subr.mxu0 0.0
    %87 = vmatpush2.msra.mxu0 0.0
    %88 = vmatprep.subr.mxu0 0.0
    %89 = vmatpush2.msra.mxu0 0.0
    %90 = vmatprep.subr.mxu0 0.0
    %91 = vmatpush2.msra.mxu0 0.0
    %92 = vmatprep.subr.mxu0 0.0
    %93 = vmatpush2.msra.mxu0 0.0
    %94 = vmatprep.subr.mxu0 0.0
    %95 = vmatpush2.msra.mxu0 0.0
    %96 = vmatprep.subr.mxu0 0.0
    %97 = vmatpush2.msra.mxu0 0.0
    %98 = vmatprep.subr.mxu0 0.0
    %99 = vmatpush2.msra.mxu0 0.0
    %100 = vmatprep.subr.mxu0 0.0
    %101 = vmatpush2.msra.mxu0 0.0
    %102 = vmatprep.subr.mxu0 0.0
    %103 = vmatpush2.msra.mxu0 0.0
    %104 = vmatprep.subr.mxu0 0.0
    %105 = vmatpush2.msra.mxu0 0.0
    %106 = vmatprep.subr.mxu0 0.0
    %107 = vmatpush2.msra.mxu0 0.0
    %108 = vmatprep.subr.mxu0 0.0
    %109 = vmatpush2.msra.mxu0 0.0
    %110 = vmatprep.subr.mxu0 0.0
    %111 = vmatpush2.msra.mxu0 0.0
    %112 = vmatprep.mubr.f32.mxu0 0.0
    %113 = vmatmul.mubr.f32.gmra.mxu0 %v46
    %v114 = vpop.f32.mrf.mxu0
    %v115 = vadd.f32 0.0, %v114
    %v116 = vpop.f32.mrf.mxu0
    %117 = vdwg.mxu0
    %119 = vrot.lane.b32.xlu0 %v115, 96
    %v120 = vpop.permute.xlu0 %119
    %vm121 = vcmask 64512
    %v122 = vsel %vm121, %v115, 0
    %v124 = vsel %vm121, %v120, 0
    %126 = vmatprep.subr.mxu0 0.0
    %127 = vmatpush1.xpose.msra.mxu0 0.0
    %128 = vmatprep.subr.mxu0 0.0
    %129 = vmatpush1.xpose.msra.mxu0 0.0
    %130 = vmatprep.subr.mxu0 0.0
    %131 = vmatpush1.xpose.msra.mxu0 0.0
    %132 = vmatprep.subr.mxu0 0.0
    %133 = vmatpush1.xpose.msra.mxu0 0.0
    %134 = vmatprep.subr.mxu0 0.0
    %135 = vmatpush1.xpose.msra.mxu0 0.0
    %136 = vmatprep.subr.mxu0 0.0
    %137 = vmatpush1.xpose.msra.mxu0 0.0
    %138 = vmatprep.subr.mxu0 0.0
    %139 = vmatpush1.xpose.msra.mxu0 0.0
    %140 = vmatprep.subr.mxu0 0.0
    %141 = vmatpush1.xpose.msra.mxu0 0.0
    %142 = vmatprep.subr.mxu0 0.0
    %143 = vmatpush1.xpose.msra.mxu0 0.0
    %144 = vmatprep.subr.mxu0 0.0
    %145 = vmatpush1.xpose.msra.mxu0 0.0
    %146 = vmatprep.subr.mxu0 0.0
    %147 = vmatpush1.xpose.msra.mxu0 0.0
    %148 = vmatprep.subr.mxu0 0.0
    %149 = vmatpush1.xpose.msra.mxu0 0.0
    %150 = vmatprep.subr.mxu0 0.0
    %151 = vmatpush1.xpose.msra.mxu0 0.0
    %152 = vmatprep.subr.mxu0 0.0
    %153 = vmatpush1.xpose.msra.mxu0 0.0
    %154 = vmatprep.subr.mxu0 0.0
    %155 = vmatpush1.xpose.msra.mxu0 0.0
    %156 = vmatprep.subr.mxu0 0.0
    %157 = vmatpush1.xpose.msra.mxu0 %v124
    %158 = vmatprep.subr.mxu0 0.0
    %159 = vmatpush2.xpose.msra.mxu0 0.0
    %160 = vmatprep.subr.mxu0 0.0
    %161 = vmatpush2.xpose.msra.mxu0 0.0
    %162 = vmatprep.subr.mxu0 0.0
    %163 = vmatpush2.xpose.msra.mxu0 0.0
    %164 = vmatprep.subr.mxu0 0.0
    %165 = vmatpush2.xpose.msra.mxu0 0.0
    %166 = vmatprep.subr.mxu0 0.0
    %167 = vmatpush2.xpose.msra.mxu0 0.0
    %168 = vmatprep.subr.mxu0 0.0
    %169 = vmatpush2.xpose.msra.mxu0 0.0
    %170 = vmatprep.subr.mxu0 0.0
    %171 = vmatpush2.xpose.msra.mxu0 0.0
    %172 = vmatprep.subr.mxu0 0.0
    %173 = vmatpush2.xpose.msra.mxu0 0.0
    %174 = vmatprep.subr.mxu0 0.0
    %175 = vmatpush2.xpose.msra.mxu0 0.0
    %176 = vmatprep.subr.mxu0 0.0
    %177 = vmatpush2.xpose.msra.mxu0 0.0
    %178 = vmatprep.subr.mxu0 0.0
    %179 = vmatpush2.xpose.msra.mxu0 0.0
    %180 = vmatprep.subr.mxu0 0.0
    %181 = vmatpush2.xpose.msra.mxu0 0.0
    %182 = vmatprep.subr.mxu0 0.0
    %183 = vmatpush2.xpose.msra.mxu0 0.0
    %184 = vmatprep.subr.mxu0 0.0
    %185 = vmatpush2.xpose.msra.mxu0 0.0
    %186 = vmatprep.subr.mxu0 0.0
    %187 = vmatpush2.xpose.msra.mxu0 0.0
    %188 = vmatprep.subr.mxu0 0.0
    %189 = vmatpush2.xpose.msra.mxu0 0.0
    %190 = vmatprep.mubr.f32.mxu0 0.0
    %191 = vmatmul.mubr.f32.gmra.mxu0 %v122
    %v192 = vpop.f32.mrf.mxu0
    %v193 = vadd.f32 0.0, %v192
    %v194 = vpop.f32.mrf.mxu0
    %195 = vdwg.mxu0
    %v196 = vmul.f32 %v193, 0.35355338
    %v197 = vadd.f32 %v196, %v22
    %v198 = vsel %vm121, %v197, -inf
    %199 = vmax.xlane.f32.xlu0 %v198
    %v200 = vpop.xlane.xlu0 %199
    %v201 = vsub.f32 %v197, %v200
    %v202 = vmul.f32 %v201, 1.442695
    %v203 = vpow.pop %v202
    %v204 = vsel %vm121, %v203, 0.0
    %205 = vadd.xlane.f32.xlu0 %v204
    %v206 = vpop.xlane.xlu0 %205
    %v207 = vrcp.pop %v206
    %v208 = vmul.f32 %v203, %v207
    %209 = vrot.lane.b32.xlu0 %v115, 64
    %v210 = vpop.permute.xlu0 %209
    %v213 = vsel %vm121, %v208, 0
    %215 = vmatprep.subr.mxu0 0.0
    %216 = vmatpush1.msra.mxu0 0.0
    %217 = vmatprep.subr.mxu0 0.0
    %218 = vmatpush1.msra.mxu0 0.0
    %219 = vmatprep.subr.mxu0 0.0
    %220 = vmatpush1.msra.mxu0 0.0
    %221 = vmatprep.subr.mxu0 0.0
    %222 = vmatpush1.msra.mxu0 0.0
    %223 = vmatprep.subr.mxu0 0.0
    %224 = vmatpush1.msra.mxu0 0.0
    %225 = vmatprep.subr.mxu0 0.0
    %226 = vmatpush1.msra.mxu0 0.0
    %227 = vmatprep.subr.mxu0 0.0
    %228 = vmatpush1.msra.mxu0 0.0
    %229 = vmatprep.subr.mxu0 0.0
    %230 = vmatpush1.msra.mxu0 0.0
    %231 = vmatprep.subr.mxu0 0.0
    %232 = vmatpush1.msra.mxu0 0.0
    %233 = vmatprep.subr.mxu0 0.0
    %234 = vmatpush1.msra.mxu0 0.0
    %235 = vmatprep.subr.mxu0 0.0
    %236 = vmatpush1.msra.mxu0 0.0
    %237 = vmatprep.subr.mxu0 0.0
    %238 = vmatpush1.msra.mxu0 0.0
    %239 = vmatprep.subr.mxu0 0.0
    %240 = vmatpush1.msra.mxu0 0.0
    %241 = vmatprep.subr.mxu0 0.0
    %242 = vmatpush1.msra.mxu0 0.0
    %243 = vmatprep.subr.mxu0 0.0
    %244 = vmatpush1.msra.mxu0 0.0
    %245 = vmatprep.subr.mxu0 0.0
    %246 = vmatpush1.msra.mxu0 %v210
    %247 = vmatprep.subr.mxu0 0.0
    %248 = vmatpush2.msra.mxu0 0.0
    %249 = vmatprep.subr.mxu0 0.0
    %250 = vmatpush2.msra.mxu0 0.0
    %251 = vmatprep.subr.mxu0 0.0
    %252 = vmatpush2.msra.mxu0 0.0
    %253 = vmatprep.subr.mxu0 0.0
    %254 = vmatpush2.msra.mxu0 0.0
    %255 = vmatprep.subr.mxu0 0.0
    %256 = vmatpush2.msra.mxu0 0.0
    %257 = vmatprep.subr.mxu0 0.0
    %258 = vmatpush2.msra.mxu0 0.0
    %259 = vmatprep.subr.mxu0 0.0
    %260 = vmatpush2.msra.mxu0 0.0
    %261 = vmatprep.subr.mxu0 0.0
    %262 = vmatpush2.msra.mxu0 0.0
    %263 = vmatprep.subr.mxu0 0.0
    %264 = vmatpush2.msra.mxu0 0.0
    %265 = vmatprep.subr.mxu0 0.0
    %266 = vmatpush2.msra.mxu0 0.0
    %267 = vmatprep.subr.mxu0 0.0
    %268 = vmatpush2.msra.mxu0 0.0
    %269 = vmatprep.subr.mxu0 0.0
    %270 = vmatpush2.msra.mxu0 0.0
    %271 = vmatprep.subr.mxu0 0.0
    %272 = vmatpush2.msra.mxu0 0.0
    %273 = vmatprep.subr.mxu0 0.0
    %274 = vmatpush2.msra.mxu0 0.0
    %275 = vmatprep.subr.mxu0 0.0
    %276 = vmatpush2.msra.mxu0 0.0
    %277 = vmatprep.subr.mxu0 0.0
    %278 = vmatpush2.msra.mxu0 0.0
    %279 = vmatprep.mubr.f32.mxu0 0.0
    %280 = vmatmul.mubr.f32.gmra.mxu0 %v213
    %v281 = vpop.f32.mrf.mxu0
    %v282 = vadd.f32 0.0, %v281
    %v283 = vpop.f32.mrf.mxu0
    %284 = vdwg.mxu0
    %285 = vrot.lane.b32.xlu0 %v115, 120
    %v286 = vpop.permute.xlu0 %285
    %287 = vrot.lane.b32.xlu0 %v115, 88
    %v288 = vpop.permute.xlu0 %287
    %v289 = vsel %vm121, %v286, 0
    %v291 = vsel %vm121, %v288, 0
    %293 = vmatprep.subr.mxu0 0.0
    %294 = vmatpush1.xpose.msra.mxu0 0.0
    %295 = vmatprep.subr.mxu0 0.0
    %296 = vmatpush1.xpose.msra.mxu0 0.0
    %297 = vmatprep.subr.mxu0 0.0
    %298 = vmatpush1.xpose.msra.mxu0 0.0
    %299 = vmatprep.subr.mxu0 0.0
    %300 = vmatpush1.xpose.msra.mxu0 0.0
    %301 = vmatprep.subr.mxu0 0.0
    %302 = vmatpush1.xpose.msra.mxu0 0.0
    %303 = vmatprep.subr.mxu0 0.0
    %304 = vmatpush1.xpose.msra.mxu0 0.0
    %305 = vmatprep.subr.mxu0 0.0
    %306 = vmatpush1.xpose.msra.mxu0 0.0
    %307 = vmatprep.subr.mxu0 0.0
    %308 = vmatpush1.xpose.msra.mxu0 0.0
    %309 = vmatprep.subr.mxu0 0.0
    %310 = vmatpush1.xpose.msra.mxu0 0.0
    %311 = vmatprep.subr.mxu0 0.0
    %312 = vmatpush1.xpose.msra.mxu0 0.0
    %313 = vmatprep.subr.mxu0 0.0
    %314 = vmatpush1.xpose.msra.mxu0 0.0
    %315 = vmatprep.subr.mxu0 0.0
    %316 = vmatpush1.xpose.msra.mxu0 0.0
    %317 = vmatprep.subr.mxu0 0.0
    %318 = vmatpush1.xpose.msra.mxu0 0.0
    %319 = vmatprep.subr.mxu0 0.0
    %320 = vmatpush1.xpose.msra.mxu0 0.0
    %321 = vmatprep.subr.mxu0 0.0
    %322 = vmatpush1.xpose.msra.mxu0 0.0
    %323 = vmatprep.subr.mxu0 0.0
    %324 = vmatpush1.xpose.msra.mxu0 %v291
    %325 = vmatprep.subr.mxu0 0.0
    %326 = vmatpush2.xpose.msra.mxu0 0.0
    %327 = vmatprep.subr.mxu0 0.0
    %328 = vmatpush2.xpose.msra.mxu0 0.0
    %329 = vmatprep.subr.mxu0 0.0
    %330 = vmatpush2.xpose.msra.mxu0 0.0
    %331 = vmatprep.subr.mxu0 0.0
    %332 = vmatpush2.xpose.msra.mxu0 0.0
    %333 = vmatprep.subr.mxu0 0.0
    %334 = vmatpush2.xpose.msra.mxu0 0.0
    %335 = vmatprep.subr.mxu0 0.0
    %336 = vmatpush2.xpose.msra.mxu0 0.0
    %337 = vmatprep.subr.mxu0 0.0
    %338 = vmatpush2.xpose.msra.mxu0 0.0
    %339 = vmatprep.subr.mxu0 0.0
    %340 = vmatpush2.xpose.msra.mxu0 0.0
    %341 = vmatprep.subr.mxu0 0.0
    %342 = vmatpush2.xpose.msra.mxu0 0.0
    %343 = vmatprep.subr.mxu0 0.0
    %344 = vmatpush2.xpose.msra.mxu0 0.0
    %345 = vmatprep.subr.mxu0 0.0
    %346 = vmatpush2.xpose.msra.mxu0 0.0
    %347 = vmatprep.subr.mxu0 0.0
    %348 = vmatpush2.xpose.msra.mxu0 0.0
    %349 = vmatprep.subr.mxu0 0.0
    %350 = vmatpush2.xpose.msra.mxu0 0.0
    %351 = vmatprep.subr.mxu0 0.0
    %352 = vmatpush2.xpose.msra.mxu0 0.0
    %353 = vmatprep.subr.mxu0 0.0
    %354 = vmatpush2.xpose.msra.mxu0 0.0
    %355 = vmatprep.subr.mxu0 0.0
    %356 = vmatpush2.xpose.msra.mxu0 0.0
    %357 = vmatprep.mubr.f32.mxu0 0.0
    %358 = vmatmul.mubr.f32.gmra.mxu0 %v289
    %v359 = vpop.f32.mrf.mxu0
    %v360 = vadd.f32 0.0, %v359
    %v361 = vpop.f32.mrf.mxu0
    %362 = vdwg.mxu0
    %v363 = vmul.f32 %v360, 0.35355338
    %v364 = vadd.f32 %v363, %v22
    %v365 = vsel %vm121, %v364, -inf
    %366 = vmax.xlane.f32.xlu0 %v365
    %v367 = vpop.xlane.xlu0 %366
    %v368 = vsub.f32 %v364, %v367
    %v369 = vmul.f32 %v368, 1.442695
    %v370 = vpow.pop %v369
    %v371 = vsel %vm121, %v370, 0.0
    %372 = vadd.xlane.f32.xlu0 %v371
    %v373 = vpop.xlane.xlu0 %372
    %v374 = vrcp.pop %v373
    %v375 = vmul.f32 %v370, %v374
    %376 = vrot.lane.b32.xlu0 %v115, 56
    %v377 = vpop.permute.xlu0 %376
    %v380 = vsel %vm121, %v375, 0
    %382 = vmatprep.subr.mxu0 0.0
    %383 = vmatpush1.msra.mxu0 0.0
    %384 = vmatprep.subr.mxu0 0.0
    %385 = vmatpush1.msra.mxu0 0.0
    %386 = vmatprep.subr.mxu0 0.0
    %387 = vmatpush1.msra.mxu0 0.0
    %388 = vmatprep.subr.mxu0 0.0
    %389 = vmatpush1.msra.mxu0 0.0
    %390 = vmatprep.subr.mxu0 0.0
    %391 = vmatpush1.msra.mxu0 0.0
    %392 = vmatprep.subr.mxu0 0.0
    %393 = vmatpush1.msra.mxu0 0.0
    %394 = vmatprep.subr.mxu0 0.0
    %395 = vmatpush1.msra.mxu0 0.0
    %396 = vmatprep.subr.mxu0 0.0
    %397 = vmatpush1.msra.mxu0 0.0
    %398 = vmatprep.subr.mxu0 0.0
    %399 = vmatpush1.msra.mxu0 0.0
    %400 = vmatprep.subr.mxu0 0.0
    %401 = vmatpush1.msra.mxu0 0.0
    %402 = vmatprep.subr.mxu0 0.0
    %403 = vmatpush1.msra.mxu0 0.0
    %404 = vmatprep.subr.mxu0 0.0
    %405 = vmatpush1.msra.mxu0 0.0
    %406 = vmatprep.subr.mxu0 0.0
    %407 = vmatpush1.msra.mxu0 0.0
    %408 = vmatprep.subr.mxu0 0.0
    %409 = vmatpush1.msra.mxu0 0.0
    %410 = vmatprep.subr.mxu0 0.0
    %411 = vmatpush1.msra.mxu0 0.0
    %412 = vmatprep.subr.mxu0 0.0
    %413 = vmatpush1.msra.mxu0 %v377
    %414 = vmatprep.subr.mxu0 0.0
    %415 = vmatpush2.msra.mxu0 0.0
    %416 = vmatprep.subr.mxu0 0.0
    %417 = vmatpush2.msra.mxu0 0.0
    %418 = vmatprep.subr.mxu0 0.0
    %419 = vmatpush2.msra.mxu0 0.0
    %420 = vmatprep.subr.mxu0 0.0
    %421 = vmatpush2.msra.mxu0 0.0
    %422 = vmatprep.subr.mxu0 0.0
    %423 = vmatpush2.msra.mxu0 0.0
    %424 = vmatprep.subr.mxu0 0.0
    %425 = vmatpush2.msra.mxu0 0.0
    %426 = vmatprep.subr.mxu0 0.0
    %427 = vmatpush2.msra.mxu0 0.0
    %428 = vmatprep.subr.mxu0 0.0
    %429 = vmatpush2.msra.mxu0 0.0
    %430 = vmatprep.subr.mxu0 0.0
    %431 = vmatpush2.msra.mxu0 0.0
    %432 = vmatprep.subr.mxu0 0.0
    %433 = vmatpush2.msra.mxu0 0.0
    %434 = vmatprep.subr.mxu0 0.0
    %435 = vmatpush2.msra.mxu0 0.0
    %436 = vmatprep.subr.mxu0 0.0
    %437 = vmatpush2.msra.mxu0 0.0
    %438 = vmatprep.subr.mxu0 0.0
    %439 = vmatpush2.msra.mxu0 0.0
    %440 = vmatprep.subr.mxu0 0.0
    %441 = vmatpush2.msra.mxu0 0.0
    %442 = vmatprep.subr.mxu0 0.0
    %443 = vmatpush2.msra.mxu0 0.0
    %444 = vmatprep.subr.mxu0 0.0
    %445 = vmatpush2.msra.mxu0 0.0
    %446 = vmatprep.mubr.f32.mxu0 0.0
    %447 = vmatmul.mubr.f32.gmra.mxu0 %v380
    %v448 = vpop.f32.mrf.mxu0
    %v449 = vadd.f32 0.0, %v448
    %v450 = vpop.f32.mrf.mxu0
    %451 = vdwg.mxu0
    %452 = vrot.lane.b32.xlu0 %v115, 112
    %v453 = vpop.permute.xlu0 %452
    %454 = vrot.lane.b32.xlu0 %v115, 80
    %v455 = vpop.permute.xlu0 %454
    %v456 = vsel %vm121, %v453, 0
    %v458 = vsel %vm121, %v455, 0
    %460 = vmatprep.subr.mxu0 0.0
    %461 = vmatpush1.xpose.msra.mxu0 0.0
    %462 = vmatprep.subr.mxu0 0.0
    %463 = vmatpush1.xpose.msra.mxu0 0.0
    %464 = vmatprep.subr.mxu0 0.0
    %465 = vmatpush1.xpose.msra.mxu0 0.0
    %466 = vmatprep.subr.mxu0 0.0
    %467 = vmatpush1.xpose.msra.mxu0 0.0
    %468 = vmatprep.subr.mxu0 0.0
    %469 = vmatpush1.xpose.msra.mxu0 0.0
    %470 = vmatprep.subr.mxu0 0.0
    %471 = vmatpush1.xpose.msra.mxu0 0.0
    %472 = vmatprep.subr.mxu0 0.0
    %473 = vmatpush1.xpose.msra.mxu0 0.0
    %474 = vmatprep.subr.mxu0 0.0
    %475 = vmatpush1.xpose.msra.mxu0 0.0
    %476 = vmatprep.subr.mxu0 0.0
    %477 = vmatpush1.xpose.msra.mxu0 0.0
    %478 = vmatprep.subr.mxu0 0.0
    %479 = vmatpush1.xpose.msra.mxu0 0.0
    %480 = vmatprep.subr.mxu0 0.0
    %481 = vmatpush1.xpose.msra.mxu0 0.0
    %482 = vmatprep.subr.mxu0 0.0
    %483 = vmatpush1.xpose.msra.mxu0 0.0
    %484 = vmatprep.subr.mxu0 0.0
    %485 = vmatpush1.xpose.msra.mxu0 0.0
    %486 = vmatprep.subr.mxu0 0.0
    %487 = vmatpush1.xpose.msra.mxu0 0.0
    %488 = vmatprep.subr.mxu0 0.0
    %489 = vmatpush1.xpose.msra.mxu0 0.0
    %490 = vmatprep.subr.mxu0 0.0
    %491 = vmatpush1.xpose.msra.mxu0 %v458
    %492 = vmatprep.subr.mxu0 0.0
    %493 = vmatpush2.xpose.msra.mxu0 0.0
    %494 = vmatprep.subr.mxu0 0.0
    %495 = vmatpush2.xpose.msra.mxu0 0.0
    %496 = vmatprep.subr.mxu0 0.0
    %497 = vmatpush2.xpose.msra.mxu0 0.0
    %498 = vmatprep.subr.mxu0 0.0
    %499 = vmatpush2.xpose.msra.mxu0 0.0
    %500 = vmatprep.subr.mxu0 0.0
    %501 = vmatpush2.xpose.msra.mxu0 0.0
    %502 = vmatprep.subr.mxu0 0.0
    %503 = vmatpush2.xpose.msra.mxu0 0.0
    %504 = vmatprep.subr.mxu0 0.0
    %505 = vmatpush2.xpose.msra.mxu0 0.0
    %506 = vmatprep.subr.mxu0 0.0
    %507 = vmatpush2.xpose.msra.mxu0 0.0
    %508 = vmatprep.subr.mxu0 0.0
    %509 = vmatpush2.xpose.msra.mxu0 0.0
    %510 = vmatprep.subr.mxu0 0.0
    %511 = vmatpush2.xpose.msra.mxu0 0.0
    %512 = vmatprep.subr.mxu0 0.0
    %513 = vmatpush2.xpose.msra.mxu0 0.0
    %514 = vmatprep.subr.mxu0 0.0
    %515 = vmatpush2.xpose.msra.mxu0 0.0
    %516 = vmatprep.subr.mxu0 0.0
    %517 = vmatpush2.xpose.msra.mxu0 0.0
    %518 = vmatprep.subr.mxu0 0.0
    %519 = vmatpush2.xpose.msra.mxu0 0.0
    %520 = vmatprep.subr.mxu0 0.0
    %521 = vmatpush2.xpose.msra.mxu0 0.0
    %522 = vmatprep.subr.mxu0 0.0
    %523 = vmatpush2.xpose.msra.mxu0 0.0
    %524 = vmatprep.mubr.f32.mxu0 0.0
    %525 = vmatmul.mubr.f32.gmra.mxu0 %v456
    %v526 = vpop.f32.mrf.mxu0
    %v527 = vadd.f32 0.0, %v526
    %v528 = vpop.f32.mrf.mxu0
    %529 = vdwg.mxu0
    %v530 = vmul.f32 %v527, 0.35355338
    %v531 = vadd.f32 %v530, %v22
    %v532 = vsel %vm121, %v531, -inf
    %533 = vmax.xlane.f32.xlu0 %v532
    %v534 = vpop.xlane.xlu0 %533
    %v535 = vsub.f32 %v531, %v534
    %v536 = vmul.f32 %v535, 1.442695
    %v537 = vpow.pop %v536
    %v538 = vsel %vm121, %v537, 0.0
    %539 = vadd.xlane.f32.xlu0 %v538
    %v540 = vpop.xlane.xlu0 %539
    %v541 = vrcp.pop %v540
    %v542 = vmul.f32 %v537, %v541
    %543 = vrot.lane.b32.xlu0 %v115, 48
    %v544 = vpop.permute.xlu0 %543
    %v547 = vsel %vm121, %v542, 0
    %549 = vmatprep.subr.mxu0 0.0
    %550 = vmatpush1.msra.mxu0 0.0
    %551 = vmatprep.subr.mxu0 0.0
    %552 = vmatpush1.msra.mxu0 0.0
    %553 = vmatprep.subr.mxu0 0.0
    %554 = vmatpush1.msra.mxu0 0.0
    %555 = vmatprep.subr.mxu0 0.0
    %556 = vmatpush1.msra.mxu0 0.0
    %557 = vmatprep.subr.mxu0 0.0
    %558 = vmatpush1.msra.mxu0 0.0
    %559 = vmatprep.subr.mxu0 0.0
    %560 = vmatpush1.msra.mxu0 0.0
    %561 = vmatprep.subr.mxu0 0.0
    %562 = vmatpush1.msra.mxu0 0.0
    %563 = vmatprep.subr.mxu0 0.0
    %564 = vmatpush1.msra.mxu0 0.0
    %565 = vmatprep.subr.mxu0 0.0
    %566 = vmatpush1.msra.mxu0 0.0
    %567 = vmatprep.subr.mxu0 0.0
    %568 = vmatpush1.msra.mxu0 0.0
    %569 = vmatprep.subr.mxu0 0.0
    %570 = vmatpush1.msra.mxu0 0.0
    %571 = vmatprep.subr.mxu0 0.0
    %572 = vmatpush1.msra.mxu0 0.0
    %573 = vmatprep.subr.mxu0 0.0
    %574 = vmatpush1.msra.mxu0 0.0
    %575 = vmatprep.subr.mxu0 0.0
    %576 = vmatpush1.msra.mxu0 0.0
    %577 = vmatprep.subr.mxu0 0.0
    %578 = vmatpush1.msra.mxu0 0.0
    %579 = vmatprep.subr.mxu0 0.0
    %580 = vmatpush1.msra.mxu0 %v544
    %581 = vmatprep.subr.mxu0 0.0
    %582 = vmatpush2.msra.mxu0 0.0
    %583 = vmatprep.subr.mxu0 0.0
    %584 = vmatpush2.msra.mxu0 0.0
    %585 = vmatprep.subr.mxu0 0.0
    %586 = vmatpush2.msra.mxu0 0.0
    %587 = vmatprep.subr.mxu0 0.0
    %588 = vmatpush2.msra.mxu0 0.0
    %589 = vmatprep.subr.mxu0 0.0
    %590 = vmatpush2.msra.mxu0 0.0
    %591 = vmatprep.subr.mxu0 0.0
    %592 = vmatpush2.msra.mxu0 0.0
    %593 = vmatprep.subr.mxu0 0.0
    %594 = vmatpush2.msra.mxu0 0.0
    %595 = vmatprep.subr.mxu0 0.0
    %596 = vmatpush2.msra.mxu0 0.0
    %597 = vmatprep.subr.mxu0 0.0
    %598 = vmatpush2.msra.mxu0 0.0
    %599 = vmatprep.subr.mxu0 0.0
    %600 = vmatpush2.msra.mxu0 0.0
    %601 = vmatprep.subr.mxu0 0.0
    %602 = vmatpush2.msra.mxu0 0.0
    %603 = vmatprep.subr.mxu0 0.0
    %604 = vmatpush2.msra.mxu0 0.0
    %605 = vmatprep.subr.mxu0 0.0
    %606 = vmatpush2.msra.mxu0 0.0
    %607 = vmatprep.subr.mxu0 0.0
    %608 = vmatpush2.msra.mxu0 0.0
    %609 = vmatprep.subr.mxu0 0.0
    %610 = vmatpush2.msra.mxu0 0.0
    %611 = vmatprep.subr.mxu0 0.0
    %612 = vmatpush2.msra.mxu0 0.0
    %613 = vmatprep.mubr.f32.mxu0 0.0
    %614 = vmatmul.mubr.f32.gmra.mxu0 %v547
    %v615 = vpop.f32.mrf.mxu0
    %v616 = vadd.f32 0.0, %v615
    %v617 = vpop.f32.mrf.mxu0
    %618 = vdwg.mxu0
    %619 = vrot.lane.b32.xlu0 %v115, 104
    %v620 = vpop.permute.xlu0 %619
    %621 = vrot.lane.b32.xlu0 %v115, 72
    %v622 = vpop.permute.xlu0 %621
    %v623 = vsel %vm121, %v620, 0
    %v625 = vsel %vm121, %v622, 0
    %627 = vmatprep.subr.mxu0 0.0
    %628 = vmatpush1.xpose.msra.mxu0 0.0
    %629 = vmatprep.subr.mxu0 0.0
    %630 = vmatpush1.xpose.msra.mxu0 0.0
    %631 = vmatprep.subr.mxu0 0.0
    %632 = vmatpush1.xpose.msra.mxu0 0.0
    %633 = vmatprep.subr.mxu0 0.0
    %634 = vmatpush1.xpose.msra.mxu0 0.0
    %635 = vmatprep.subr.mxu0 0.0
    %636 = vmatpush1.xpose.msra.mxu0 0.0
    %637 = vmatprep.subr.mxu0 0.0
    %638 = vmatpush1.xpose.msra.mxu0 0.0
    %639 = vmatprep.subr.mxu0 0.0
    %640 = vmatpush1.xpose.msra.mxu0 0.0
    %641 = vmatprep.subr.mxu0 0.0
    %642 = vmatpush1.xpose.msra.mxu0 0.0
    %643 = vmatprep.subr.mxu0 0.0
    %644 = vmatpush1.xpose.msra.mxu0 0.0
    %645 = vmatprep.subr.mxu0 0.0
    %646 = vmatpush1.xpose.msra.mxu0 0.0
    %647 = vmatprep.subr.mxu0 0.0
    %648 = vmatpush1.xpose.msra.mxu0 0.0
    %649 = vmatprep.subr.mxu0 0.0
    %650 = vmatpush1.xpose.msra.mxu0 0.0
    %651 = vmatprep.subr.mxu0 0.0
    %652 = vmatpush1.xpose.msra.mxu0 0.0
    %653 = vmatprep.subr.mxu0 0.0
    %654 = vmatpush1.xpose.msra.mxu0 0.0
    %655 = vmatprep.subr.mxu0 0.0
    %656 = vmatpush1.xpose.msra.mxu0 0.0
    %657 = vmatprep.subr.mxu0 0.0
    %658 = vmatpush1.xpose.msra.mxu0 %v625
    %659 = vmatprep.subr.mxu0 0.0
    %660 = vmatpush2.xpose.msra.mxu0 0.0
    %661 = vmatprep.subr.mxu0 0.0
    %662 = vmatpush2.xpose.msra.mxu0 0.0
    %663 = vmatprep.subr.mxu0 0.0
    %664 = vmatpush2.xpose.msra.mxu0 0.0
    %665 = vmatprep.subr.mxu0 0.0
    %666 = vmatpush2.xpose.msra.mxu0 0.0
    %667 = vmatprep.subr.mxu0 0.0
    %668 = vmatpush2.xpose.msra.mxu0 0.0
    %669 = vmatprep.subr.mxu0 0.0
    %670 = vmatpush2.xpose.msra.mxu0 0.0
    %671 = vmatprep.subr.mxu0 0.0
    %672 = vmatpush2.xpose.msra.mxu0 0.0
    %673 = vmatprep.subr.mxu0 0.0
    %674 = vmatpush2.xpose.msra.mxu0 0.0
    %675 = vmatprep.subr.mxu0 0.0
    %676 = vmatpush2.xpose.msra.mxu0 0.0
    %677 = vmatprep.subr.mxu0 0.0
    %678 = vmatpush2.xpose.msra.mxu0 0.0
    %679 = vmatprep.subr.mxu0 0.0
    %680 = vmatpush2.xpose.msra.mxu0 0.0
    %681 = vmatprep.subr.mxu0 0.0
    %682 = vmatpush2.xpose.msra.mxu0 0.0
    %683 = vmatprep.subr.mxu0 0.0
    %684 = vmatpush2.xpose.msra.mxu0 0.0
    %685 = vmatprep.subr.mxu0 0.0
    %686 = vmatpush2.xpose.msra.mxu0 0.0
    %687 = vmatprep.subr.mxu0 0.0
    %688 = vmatpush2.xpose.msra.mxu0 0.0
    %689 = vmatprep.subr.mxu0 0.0
    %690 = vmatpush2.xpose.msra.mxu0 0.0
    %691 = vmatprep.mubr.f32.mxu0 0.0
    %692 = vmatmul.mubr.f32.gmra.mxu0 %v623
    %v693 = vpop.f32.mrf.mxu0
    %v694 = vadd.f32 0.0, %v693
    %v695 = vpop.f32.mrf.mxu0
    %696 = vdwg.mxu0
    %v697 = vmul.f32 %v694, 0.35355338
    %v698 = vadd.f32 %v697, %v22
    %v699 = vsel %vm121, %v698, -inf
    %700 = vmax.xlane.f32.xlu0 %v699
    %v701 = vpop.xlane.xlu0 %700
    %v702 = vsub.f32 %v698, %v701
    %v703 = vmul.f32 %v702, 1.442695
    %v704 = vpow.pop %v703
    %v705 = vsel %vm121, %v704, 0.0
    %706 = vadd.xlane.f32.xlu0 %v705
    %v707 = vpop.xlane.xlu0 %706
    %v708 = vrcp.pop %v707
    %v709 = vmul.f32 %v704, %v708
    %710 = vrot.lane.b32.xlu0 %v115, 40
    %v711 = vpop.permute.xlu0 %710
    %v714 = vsel %vm121, %v709, 0
    %716 = vmatprep.subr.mxu0 0.0
    %717 = vmatpush1.msra.mxu0 0.0
    %718 = vmatprep.subr.mxu0 0.0
    %719 = vmatpush1.msra.mxu0 0.0
    %720 = vmatprep.subr.mxu0 0.0
    %721 = vmatpush1.msra.mxu0 0.0
    %722 = vmatprep.subr.mxu0 0.0
    %723 = vmatpush1.msra.mxu0 0.0
    %724 = vmatprep.subr.mxu0 0.0
    %725 = vmatpush1.msra.mxu0 0.0
    %726 = vmatprep.subr.mxu0 0.0
    %727 = vmatpush1.msra.mxu0 0.0
    %728 = vmatprep.subr.mxu0 0.0
    %729 = vmatpush1.msra.mxu0 0.0
    %730 = vmatprep.subr.mxu0 0.0
    %731 = vmatpush1.msra.mxu0 0.0
    %732 = vmatprep.subr.mxu0 0.0
    %733 = vmatpush1.msra.mxu0 0.0
    %734 = vmatprep.subr.mxu0 0.0
    %735 = vmatpush1.msra.mxu0 0.0
    %736 = vmatprep.subr.mxu0 0.0
    %737 = vmatpush1.msra.mxu0 0.0
    %738 = vmatprep.subr.mxu0 0.0
    %739 = vmatpush1.msra.mxu0 0.0
    %740 = vmatprep.subr.mxu0 0.0
    %741 = vmatpush1.msra.mxu0 0.0
    %742 = vmatprep.subr.mxu0 0.0
    %743 = vmatpush1.msra.mxu0 0.0
    %744 = vmatprep.subr.mxu0 0.0
    %745 = vmatpush1.msra.mxu0 0.0
    %746 = vmatprep.subr.mxu0 0.0
    %747 = vmatpush1.msra.mxu0 %v711
    %748 = vmatprep.subr.mxu0 0.0
    %749 = vmatpush2.msra.mxu0 0.0
    %750 = vmatprep.subr.mxu0 0.0
    %751 = vmatpush2.msra.mxu0 0.0
    %752 = vmatprep.subr.mxu0 0.0
    %753 = vmatpush2.msra.mxu0 0.0
    %754 = vmatprep.subr.mxu0 0.0
    %755 = vmatpush2.msra.mxu0 0.0
    %756 = vmatprep.subr.mxu0 0.0
    %757 = vmatpush2.msra.mxu0 0.0
    %758 = vmatprep.subr.mxu0 0.0
    %759 = vmatpush2.msra.mxu0 0.0
    %760 = vmatprep.subr.mxu0 0.0
    %761 = vmatpush2.msra.mxu0 0.0
    %762 = vmatprep.subr.mxu0 0.0
    %763 = vmatpush2.msra.mxu0 0.0
    %764 = vmatprep.subr.mxu0 0.0
    %765 = vmatpush2.msra.mxu0 0.0
    %766 = vmatprep.subr.mxu0 0.0
    %767 = vmatpush2.msra.mxu0 0.0
    %768 = vmatprep.subr.mxu0 0.0
    %769 = vmatpush2.msra.mxu0 0.0
    %770 = vmatprep.subr.mxu0 0.0
    %771 = vmatpush2.msra.mxu0 0.0
    %772 = vmatprep.subr.mxu0 0.0
    %773 = vmatpush2.msra.mxu0 0.0
    %774 = vmatprep.subr.mxu0 0.0
    %775 = vmatpush2.msra.mxu0 0.0
    %776 = vmatprep.subr.mxu0 0.0
    %777 = vmatpush2.msra.mxu0 0.0
    %778 = vmatprep.subr.mxu0 0.0
    %779 = vmatpush2.msra.mxu0 0.0
    %780 = vmatprep.mubr.f32.mxu0 0.0
    %781 = vmatmul.mubr.f32.gmra.mxu0 %v714
    %v782 = vpop.f32.mrf.mxu0
    %v783 = vadd.f32 0.0, %v782
    %v784 = vpop.f32.mrf.mxu0
    %785 = vdwg.mxu0
    %787 = vrot.lane.b32.xlu0 %v449, 8
    %v788 = vpop.permute.xlu0 %787
    %791 = vrot.lane.b32.xlu0 %v616, 16
    %v792 = vpop.permute.xlu0 %791
    %795 = vrot.lane.b32.xlu0 %v783, 24
    %v796 = vpop.permute.xlu0 %795
    %v798 = vsel %vm121, %v282, %v788
    %vm799 = vcmask 130048
    %v800 = vsel %vm799, %v798, %v792
    %vm801 = vcmask 195584
    %v802 = vsel %vm801, %v800, %v796
    %v804 = vsel %vm44, %v802, 0
    %806 = vmatprep.subr.mxu0 0.0
    %807 = vmatpush1.msra.mxu0 0.0
    %808 = vmatprep.subr.mxu0 0.0
    %809 = vmatpush1.msra.mxu0 0.0
    %810 = vmatprep.subr.mxu0 0.0
    %811 = vmatpush1.msra.mxu0 0.0
    %812 = vmatprep.subr.mxu0 0.0
    %813 = vmatpush1.msra.mxu0 0.0
    %814 = vmatprep.subr.mxu0 0.0
    %815 = vmatpush1.msra.mxu0 0.0
    %816 = vmatprep.subr.mxu0 0.0
    %817 = vmatpush1.msra.mxu0 0.0
    %818 = vmatprep.subr.mxu0 0.0
    %819 = vmatpush1.msra.mxu0 0.0
    %820 = vmatprep.subr.mxu0 0.0
    %821 = vmatpush1.msra.mxu0 0.0
    %822 = vmatprep.subr.mxu0 0.0
    %823 = vmatpush1.msra.mxu0 0.0
    %824 = vmatprep.subr.mxu0 0.0
    %825 = vmatpush1.msra.mxu0 0.0
    %826 = vmatprep.subr.mxu0 0.0
    %827 = vmatpush1.msra.mxu0 0.0
    %828 = vmatprep.subr.mxu0 0.0
    %829 = vmatpush1.msra.mxu0 0.0
    %830 = vmatprep.subr.mxu0 0.0
    %831 = vmatpush1.msra.mxu0 %v42
    %832 = vmatprep.subr.mxu0 0.0
    %833 = vmatpush1.msra.mxu0 %v41
    %834 = vmatprep.subr.mxu0 0.0
    %835 = vmatpush1.msra.mxu0 %v40
    %836 = vmatprep.subr.mxu0 0.0
    %837 = vmatpush1.msra.mxu0 %v39
    %838 = vmatprep.subr.mxu0 0.0
    %839 = vmatpush2.msra.mxu0 0.0
    %840 = vmatprep.subr.mxu0 0.0
    %841 = vmatpush2.msra.mxu0 0.0
    %842 = vmatprep.subr.mxu0 0.0
    %843 = vmatpush2.msra.mxu0 0.0
    %844 = vmatprep.subr.mxu0 0.0
    %845 = vmatpush2.msra.mxu0 0.0
    %846 = vmatprep.subr.mxu0 0.0
    %847 = vmatpush2.msra.mxu0 0.0
    %848 = vmatprep.subr.mxu0 0.0
    %849 = vmatpush2.msra.mxu0 0.0
    %850 = vmatprep.subr.mxu0 0.0
    %851 = vmatpush2.msra.mxu0 0.0
    %852 = vmatprep.subr.mxu0 0.0
    %853 = vmatpush2.msra.mxu0 0.0
    %854 = vmatprep.subr.mxu0 0.0
    %855 = vmatpush2.msra.mxu0 0.0
    %856 = vmatprep.subr.mxu0 0.0
    %857 = vmatpush2.msra.mxu0 0.0
    %858 = vmatprep.subr.mxu0 0.0
    %859 = vmatpush2.msra.mxu0 0.0
    %860 = vmatprep.subr.mxu0 0.0
    %861 = vmatpush2.msra.mxu0 0.0
    %862 = vmatprep.subr.mxu0 0.0
    %863 = vmatpush2.msra.mxu0 0.0
    %864 = vmatprep.subr.mxu0 0.0
    %865 = vmatpush2.msra.mxu0 0.0
    %866 = vmatprep.subr.mxu0 0.0
    %867 = vmatpush2.msra.mxu0 0.0
    %868 = vmatprep.subr.mxu0 0.0
    %869 = vmatpush2.msra.mxu0 0.0
    %870 = vmatprep.mubr.f32.mxu0 0.0
    %871 = vmatmul.mubr.f32.gmra.mxu0 %v804
    %v872 = vpop.f32.mrf.mxu0
    %v873 = vadd.f32 0.0, %v872
    %v874 = vpop.f32.mrf.mxu0
    %875 = vdwg.mxu0
    %v876 = vadd.f32 %v21, %v873
    %v877 = vsel %vm44, %v876, 0.0
    %878 = vadd.xlane.f32.xlu0 %v877
    %v879 = vpop.xlane.xlu0 %878
    %v880 = vrcp.pop 32.0
    %v881 = vmul.f32 %v879, %v880
    %v882 = vsub.f32 %v876, %v881
    %v883 = vmul.f32 %v882, %v882
    %v884 = vsel %vm44, %v883, 0.0
    %885 = vadd.xlane.f32.xlu0 %v884
    %v886 = vpop.xlane.xlu0 %885
    %v887 = vmul.f32 %v886, %v880
    %v888 = vadd.f32 %v887, 1e-05
    %v889 = vrsqrt.pop %v888
    %v890 = vmul.f32 %v882, %v889
    %v891 = vlaneseq
    %v892 = vshrl.u32 %v891, 7
    %v893 = vsub.s32 2, %v892
    %v894 = vrot.slane %v43, %v893
    %v895 = vmul.f32 %v890, %v894
    %v896 = vlaneseq
    %v897 = vshrl.u32 %v896, 7
    %v898 = vsub.s32 3, %v897
    %v899 = vrot.slane %v43, %v898
    %v900 = vadd.f32 %v895, %v899
    %v901 = vlaneseq
    %v902 = vshrl.u32 %v901, 7
    %v903 = vsub.s32 0, %v902
    %v904 = vrot.slane %v43, %v903
    %913 = vrot.lane.b32.xlu0 %v23, 32
    %v914 = vpop.permute.xlu0 %913
    %915 = vrot.lane.b32.xlu0 %v24, 32
    %v916 = vpop.permute.xlu0 %915
    %917 = vrot.lane.b32.xlu0 %v25, 32
    %v918 = vpop.permute.xlu0 %917
    %919 = vrot.lane.b32.xlu0 %v26, 32
    %v920 = vpop.permute.xlu0 %919
    %921 = vrot.lane.b32.xlu0 %v27, 32
    %v922 = vpop.permute.xlu0 %921
    %923 = vrot.lane.b32.xlu0 %v28, 32
    %v924 = vpop.permute.xlu0 %923
    %925 = vrot.lane.b32.xlu0 %v29, 32
    %v926 = vpop.permute.xlu0 %925
    %927 = vrot.lane.b32.xlu0 %v30, 32
    %v928 = vpop.permute.xlu0 %927
    %v929 = vsel %vm44, %v914, %v916
    %v930 = vsel %vm44, %v918, %v920
    %v931 = vsel %vm44, %v922, %v924
    %v932 = vsel %vm44, %v926, %v928
    %v938 = vsel %vm44, %v900, 0
    %940 = vmatprep.subr.mxu0 0.0
    %941 = vmatpush1.msra.mxu0 0.0
    %942 = vmatprep.subr.mxu0 0.0
    %943 = vmatpush1.msra.mxu0 0.0
    %944 = vmatprep.subr.mxu0 0.0
    %945 = vmatpush1.msra.mxu0 0.0
    %946 = vmatprep.subr.mxu0 0.0
    %947 = vmatpush1.msra.mxu0 0.0
    %948 = vmatprep.subr.mxu0 0.0
    %949 = vmatpush1.msra.mxu0 0.0
    %950 = vmatprep.subr.mxu0 0.0
    %951 = vmatpush1.msra.mxu0 0.0
    %952 = vmatprep.subr.mxu0 0.0
    %953 = vmatpush1.msra.mxu0 0.0
    %954 = vmatprep.subr.mxu0 0.0
    %955 = vmatpush1.msra.mxu0 0.0
    %956 = vmatprep.subr.mxu0 0.0
    %957 = vmatpush1.msra.mxu0 0.0
    %958 = vmatprep.subr.mxu0 0.0
    %959 = vmatpush1.msra.mxu0 0.0
    %960 = vmatprep.subr.mxu0 0.0
    %961 = vmatpush1.msra.mxu0 0.0
    %962 = vmatprep.subr.mxu0 0.0
    %963 = vmatpush1.msra.mxu0 0.0
    %964 = vmatprep.subr.mxu0 0.0
    %965 = vmatpush1.msra.mxu0 %v932
    %966 = vmatprep.subr.mxu0 0.0
    %967 = vmatpush1.msra.mxu0 %v931
    %968 = vmatprep.subr.mxu0 0.0
    %969 = vmatpush1.msra.mxu0 %v930
    %970 = vmatprep.subr.mxu0 0.0
    %971 = vmatpush1.msra.mxu0 %v929
    %972 = vmatprep.subr.mxu0 0.0
    %973 = vmatpush2.msra.mxu0 0.0
    %974 = vmatprep.subr.mxu0 0.0
    %975 = vmatpush2.msra.mxu0 0.0
    %976 = vmatprep.subr.mxu0 0.0
    %977 = vmatpush2.msra.mxu0 0.0
    %978 = vmatprep.subr.mxu0 0.0
    %979 = vmatpush2.msra.mxu0 0.0
    %980 = vmatprep.subr.mxu0 0.0
    %981 = vmatpush2.msra.mxu0 0.0
    %982 = vmatprep.subr.mxu0 0.0
    %983 = vmatpush2.msra.mxu0 0.0
    %984 = vmatprep.subr.mxu0 0.0
    %985 = vmatpush2.msra.mxu0 0.0
    %986 = vmatprep.subr.mxu0 0.0
    %987 = vmatpush2.msra.mxu0 0.0
    %988 = vmatprep.subr.mxu0 0.0
    %989 = vmatpush2.msra.mxu0 0.0
    %990 = vmatprep.subr.mxu0 0.0
    %991 = vmatpush2.msra.mxu0 0.0
    %992 = vmatprep.subr.mxu0 0.0
    %993 = vmatpush2.msra.mxu0 0.0
    %994 = vmatprep.subr.mxu0 0.0
    %995 = vmatpush2.msra.mxu0 0.0
    %996 = vmatprep.subr.mxu0 0.0
    %997 = vmatpush2.msra.mxu0 0.0
    %998 = vmatprep.subr.mxu0 0.0
    %999 = vmatpush2.msra.mxu0 0.0
    %1000 = vmatprep.subr.mxu0 0.0
    %1001 = vmatpush2.msra.mxu0 0.0
    %1002 = vmatprep.subr.mxu0 0.0
    %1003 = vmatpush2.msra.mxu0 0.0
    %1004 = vmatprep.mubr.f32.mxu0 0.0
    %1005 = vmatmul.mubr.f32.gmra.mxu0 %v938
    %v1006 = vpop.f32.mrf.mxu0
    %v1007 = vadd.f32 %v904, %v1006
    %v1008 = vpop.f32.mrf.mxu0
    %1009 = vdwg.mxu0
    %v1010 = vmul.f32 %v1007, 0.5
    %v1011 = vmul.f32 %v1007, 0.70710677
    %vm1012 = vcmp.ge.f32.partialorder %v1011, 0.0
    %v1013 = vsel %vm1012, 1.0, -1.0
    %v1014 = vand.u32 2147483647, %v1011
    %v1015 = vmul.f32 %v1014, 0.3275911
    %v1016 = vadd.f32 %v1015, 1.0
    %v1017 = vrcp.pop %v1016
    %v1018 = vmul.f32 %v1017, 1.0614054
    %v1019 = vadd.f32 %v1018, -1.4531521
    %v1020 = vmul.f32 %v1017, %v1019
    %v1021 = vadd.f32 %v1020, 1.4214138
    %v1022 = vmul.f32 %v1017, %v1021
    %v1023 = vadd.f32 %v1022, -0.28449672
    %v1024 = vmul.f32 %v1017, %v1023
    %v1025 = vadd.f32 %v1024, 0.2548296
    %v1026 = vmul.f32 %v1017, %v1025
    %v1027 = vsub.f32 0.0, %v1014
    %v1028 = vmul.f32 %v1027, %v1014
    %v1029 = vmul.f32 %v1028, 1.442695
    %v1030 = vpow.pop %v1029
    %v1031 = vmul.f32 %v1026, %v1030
    %v1032 = vsub.f32 1.0, %v1031
    %v1033 = vmul.f32 %v1013, %v1032
    %v1034 = vadd.f32 %v1033, 1.0
    %v1035 = vmul.f32 %v1010, %v1034
    %v1036 = vlaneseq
    %v1037 = vshrl.u32 %v1036, 7
    %v1038 = vsub.s32 1, %v1037
    %v1039 = vrot.slane %v43, %v1038
    %vm1040 = vcmask 523264
    %v1042 = vsel %vm1040, %v1035, 0
    %1044 = vmatprep.subr.mxu0 0.0
    %1045 = vmatpush1.msra.mxu0 0.0
    %1046 = vmatprep.subr.mxu0 0.0
    %1047 = vmatpush1.msra.mxu0 0.0
    %1048 = vmatprep.subr.mxu0 0.0
    %1049 = vmatpush1.msra.mxu0 0.0
    %1050 = vmatprep.subr.mxu0 0.0
    %1051 = vmatpush1.msra.mxu0 0.0
    %1052 = vmatprep.subr.mxu0 0.0
    %1053 = vmatpush1.msra.mxu0 0.0
    %1054 = vmatprep.subr.mxu0 0.0
    %1055 = vmatpush1.msra.mxu0 0.0
    %1056 = vmatprep.subr.mxu0 0.0
    %1057 = vmatpush1.msra.mxu0 0.0
    %1058 = vmatprep.subr.mxu0 0.0
    %1059 = vmatpush1.msra.mxu0 0.0
    %1060 = vmatprep.subr.mxu0 0.0
    %1061 = vmatpush1.msra.mxu0 %v38
    %1062 = vmatprep.subr.mxu0 0.0
    %1063 = vmatpush1.msra.mxu0 %v37
    %1064 = vmatprep.subr.mxu0 0.0
    %1065 = vmatpush1.msra.mxu0 %v36
    %1066 = vmatprep.subr.mxu0 0.0
    %1067 = vmatpush1.msra.mxu0 %v35
    %1068 = vmatprep.subr.mxu0 0.0
    %1069 = vmatpush1.msra.mxu0 %v34
    %1070 = vmatprep.subr.mxu0 0.0
    %1071 = vmatpush1.msra.mxu0 %v33
    %1072 = vmatprep.subr.mxu0 0.0
    %1073 = vmatpush1.msra.mxu0 %v32
    %1074 = vmatprep.subr.mxu0 0.0
    %1075 = vmatpush1.msra.mxu0 %v31
    %1076 = vmatprep.subr.mxu0 0.0
    %1077 = vmatpush2.msra.mxu0 0.0
    %1078 = vmatprep.subr.mxu0 0.0
    %1079 = vmatpush2.msra.mxu0 0.0
    %1080 = vmatprep.subr.mxu0 0.0
    %1081 = vmatpush2.msra.mxu0 0.0
    %1082 = vmatprep.subr.mxu0 0.0
    %1083 = vmatpush2.msra.mxu0 0.0
    %1084 = vmatprep.subr.mxu0 0.0
    %1085 = vmatpush2.msra.mxu0 0.0
    %1086 = vmatprep.subr.mxu0 0.0
    %1087 = vmatpush2.msra.mxu0 0.0
    %1088 = vmatprep.subr.mxu0 0.0
    %1089 = vmatpush2.msra.mxu0 0.0
    %1090 = vmatprep.subr.mxu0 0.0
    %1091 = vmatpush2.msra.mxu0 0.0
    %1092 = vmatprep.subr.mxu0 0.0
    %1093 = vmatpush2.msra.mxu0 0.0
    %1094 = vmatprep.subr.mxu0 0.0
    %1095 = vmatpush2.msra.mxu0 0.0
    %1096 = vmatprep.subr.mxu0 0.0
    %1097 = vmatpush2.msra.mxu0 0.0
    %1098 = vmatprep.subr.mxu0 0.0
    %1099 = vmatpush2.msra.mxu0 0.0
    %1100 = vmatprep.subr.mxu0 0.0
    %1101 = vmatpush2.msra.mxu0 0.0
    %1102 = vmatprep.subr.mxu0 0.0
    %1103 = vmatpush2.msra.mxu0 0.0
    %1104 = vmatprep.subr.mxu0 0.0
    %1105 = vmatpush2.msra.mxu0 0.0
    %1106 = vmatprep.subr.mxu0 0.0
    %1107 = vmatpush2.msra.mxu0 0.0
    %1108 = vmatprep.mubr.f32.mxu0 0.0
    %1109 = vmatmul.mubr.f32.gmra.mxu0 %v1042
    %v1110 = vpop.f32.mrf.mxu0
    %v1111 = vadd.f32 %v1039, %v1110
    %v1112 = vpop.f32.mrf.mxu0
    %1113 = vdwg.mxu0
    %v1114 = vadd.f32 %v876, %v1111
    %v1115 = vsel %vm44, %v1114, 0.0
    %1116 = vadd.xlane.f32.xlu0 %v1115
    %v1117 = vpop.xlane.xlu0 %1116
    %v1118 = vmul.f32 %v1117, %v880
    %v1119 = vsub.f32 %v1114, %v1118
    %v1120 = vmul.f32 %v1119, %v1119
    %v1121 = vsel %vm44, %v1120, 0.0
    %1122 = vadd.xlane.f32.xlu0 %v1121
    %v1123 = vpop.xlane.xlu0 %1122
    %v1124 = vmul.f32 %v1123, %v880
    %v1125 = vadd.f32 %v1124, 1e-05
    %v1126 = vrsqrt.pop %v1125
    %v1127 = vmul.f32 %v1119, %v1126
    %v1128 = vlaneseq
    %v1129 = vshrl.u32 %v1128, 7
    %v1130 = vsub.s32 4, %v1129
    %v1131 = vrot.slane %v43, %v1130
    %v1132 = vmul.f32 %v1127, %v1131
    %v1133 = vlaneseq
    %v1134 = vshrl.u32 %v1133, 7
    %v1135 = vsub.s32 5, %v1134
    %v1136 = vrot.slane %v43, %v1135
    %v1137 = vadd.f32 %v1132, %v1136
    %s1138 = scalar_lea.vmem %s2, 64
    %v1139 = vld [vmem:[%s1138] sm:$0xff]
    %v1140 = vld [vmem:[%s1138 + $0x8] sm:$0xff]
    %v1141 = vld [vmem:[%s1138 + $0x10] sm:$0xff]
    %v1142 = vld [vmem:[%s1138 + $0x18] sm:$0xff]
    %v1143 = vld [vmem:[%s1138 + $0x20] sm:$0xff]
    %v1144 = vld [vmem:[%s1138 + $0x28] sm:$0xff]
    %v1145 = vld [vmem:[%s1138 + $0x30] sm:$0xff]
    %v1146 = vld [vmem:[%s1138 + $0x38] sm:$0xff]
    %s1147 = scalar_lea.vmem %s3, 96
    %v1148 = vld [vmem:[%s1147] sm:$0xff]
    %v1149 = vld [vmem:[%s1147 + $0x8] sm:$0xff]
    %v1150 = vld [vmem:[%s1147 + $0x10] sm:$0xff]
    %v1151 = vld [vmem:[%s1147 + $0x18] sm:$0xff]
    %v1152 = vld [vmem:[%s1147 + $0x20] sm:$0xff]
    %v1153 = vld [vmem:[%s1147 + $0x28] sm:$0xff]
    %v1154 = vld [vmem:[%s1147 + $0x30] sm:$0xff]
    %v1155 = vld [vmem:[%s1147 + $0x38] sm:$0xff]
    %v1156 = vld [vmem:[%s1147 + $0x40] sm:$0xff]
    %v1157 = vld [vmem:[%s1147 + $0x48] sm:$0xff]
    %v1158 = vld [vmem:[%s1147 + $0x50] sm:$0xff]
    %v1159 = vld [vmem:[%s1147 + $0x58] sm:$0xff]
    %s1160 = scalar_lea.vmem %s4, 8
    %v1161 = vld [vmem:[%s1160] sm:$0x3f]
    %v1163 = vsel %vm44, %v1137, 0
    %1165 = vmatprep.subr.mxu0 0.0
    %1166 = vmatpush1.msra.mxu0 0.0
    %1167 = vmatprep.subr.mxu0 0.0
    %1168 = vmatpush1.msra.mxu0 0.0
    %1169 = vmatprep.subr.mxu0 0.0
    %1170 = vmatpush1.msra.mxu0 0.0
    %1171 = vmatprep.subr.mxu0 0.0
    %1172 = vmatpush1.msra.mxu0 0.0
    %1173 = vmatprep.subr.mxu0 0.0
    %1174 = vmatpush1.msra.mxu0 0.0
    %1175 = vmatprep.subr.mxu0 0.0
    %1176 = vmatpush1.msra.mxu0 0.0
    %1177 = vmatprep.subr.mxu0 0.0
    %1178 = vmatpush1.msra.mxu0 0.0
    %1179 = vmatprep.subr.mxu0 0.0
    %1180 = vmatpush1.msra.mxu0 0.0
    %1181 = vmatprep.subr.mxu0 0.0
    %1182 = vmatpush1.msra.mxu0 0.0
    %1183 = vmatprep.subr.mxu0 0.0
    %1184 = vmatpush1.msra.mxu0 0.0
    %1185 = vmatprep.subr.mxu0 0.0
    %1186 = vmatpush1.msra.mxu0 0.0
    %1187 = vmatprep.subr.mxu0 0.0
    %1188 = vmatpush1.msra.mxu0 0.0
    %1189 = vmatprep.subr.mxu0 0.0
    %1190 = vmatpush1.msra.mxu0 %v1145
    %1191 = vmatprep.subr.mxu0 0.0
    %1192 = vmatpush1.msra.mxu0 %v1143
    %1193 = vmatprep.subr.mxu0 0.0
    %1194 = vmatpush1.msra.mxu0 %v1141
    %1195 = vmatprep.subr.mxu0 0.0
    %1196 = vmatpush1.msra.mxu0 %v1139
    %1197 = vmatprep.subr.mxu0 0.0
    %1198 = vmatpush2.msra.mxu0 0.0
    %1199 = vmatprep.subr.mxu0 0.0
    %1200 = vmatpush2.msra.mxu0 0.0
    %1201 = vmatprep.subr.mxu0 0.0
    %1202 = vmatpush2.msra.mxu0 0.0
    %1203 = vmatprep.subr.mxu0 0.0
    %1204 = vmatpush2.msra.mxu0 0.0
    %1205 = vmatprep.subr.mxu0 0.0
    %1206 = vmatpush2.msra.mxu0 0.0
    %1207 = vmatprep.subr.mxu0 0.0
    %1208 = vmatpush2.msra.mxu0 0.0
    %1209 = vmatprep.subr.mxu0 0.0
    %1210 = vmatpush2.msra.mxu0 0.0
    %1211 = vmatprep.subr.mxu0 0.0
    %1212 = vmatpush2.msra.mxu0 0.0
    %1213 = vmatprep.subr.mxu0 0.0
    %1214 = vmatpush2.msra.mxu0 0.0
    %1215 = vmatprep.subr.mxu0 0.0
    %1216 = vmatpush2.msra.mxu0 0.0
    %1217 = vmatprep.subr.mxu0 0.0
    %1218 = vmatpush2.msra.mxu0 0.0
    %1219 = vmatprep.subr.mxu0 0.0
    %1220 = vmatpush2.msra.mxu0 0.0
    %1221 = vmatprep.subr.mxu0 0.0
    %1222 = vmatpush2.msra.mxu0 0.0
    %1223 = vmatprep.subr.mxu0 0.0
    %1224 = vmatpush2.msra.mxu0 0.0
    %1225 = vmatprep.subr.mxu0 0.0
    %1226 = vmatpush2.msra.mxu0 0.0
    %1227 = vmatprep.subr.mxu0 0.0
    %1228 = vmatpush2.msra.mxu0 0.0
    %1229 = vmatprep.mubr.f32.mxu0 0.0
    %1230 = vmatmul.mubr.f32.gmra.mxu0 %v1163
    %v1231 = vpop.f32.mrf.mxu0
    %v1232 = vadd.f32 0.0, %v1231
    %v1233 = vpop.f32.mrf.mxu0
    %1234 = vdwg.mxu0
    %1236 = vrot.lane.b32.xlu0 %v1232, 96
    %v1237 = vpop.permute.xlu0 %1236
    %v1238 = vsel %vm121, %v1232, 0
    %v1240 = vsel %vm121, %v1237, 0
    %1242 = vmatprep.subr.mxu0 0.0
    %1243 = vmatpush1.xpose.msra.mxu0 0.0
    %1244 = vmatprep.subr.mxu0 0.0
    %1245 = vmatpush1.xpose.msra.mxu0 0.0
    %1246 = vmatprep.subr.mxu0 0.0
    %1247 = vmatpush1.xpose.msra.mxu0 0.0
    %1248 = vmatprep.subr.mxu0 0.0
    %1249 = vmatpush1.xpose.msra.mxu0 0.0
    %1250 = vmatprep.subr.mxu0 0.0
    %1251 = vmatpush1.xpose.msra.mxu0 0.0
    %1252 = vmatprep.subr.mxu0 0.0
    %1253 = vmatpush1.xpose.msra.mxu0 0.0
    %1254 = vmatprep.subr.mxu0 0.0
    %1255 = vmatpush1.xpose.msra.mxu0 0.0
    %1256 = vmatprep.subr.mxu0 0.0
    %1257 = vmatpush1.xpose.msra.mxu0 0.0
    %1258 = vmatprep.subr.mxu0 0.0
    %1259 = vmatpush1.xpose.msra.mxu0 0.0
    %1260 = vmatprep.subr.mxu0 0.0
    %1261 = vmatpush1.xpose.msra.mxu0 0.0
    %1262 = vmatprep.subr.mxu0 0.0
    %1263 = vmatpush1.xpose.msra.mxu0 0.0
    %1264 = vmatprep.subr.mxu0 0.0
    %1265 = vmatpush1.xpose.msra.mxu0 0.0
    %1266 = vmatprep.subr.mxu0 0.0
    %1267 = vmatpush1.xpose.msra.mxu0 0.0
    %1268 = vmatprep.subr.mxu0 0.0
    %1269 = vmatpush1.xpose.msra.mxu0 0.0
    %1270 = vmatprep.subr.mxu0 0.0
    %1271 = vmatpush1.xpose.msra.mxu0 0.0
    %1272 = vmatprep.subr.mxu0 0.0
    %1273 = vmatpush1.xpose.msra.mxu0 %v1240
    %1274 = vmatprep.subr.mxu0 0.0
    %1275 = vmatpush2.xpose.msra.mxu0 0.0
    %1276 = vmatprep.subr.mxu0 0.0
    %1277 = vmatpush2.xpose.msra.mxu0 0.0
    %1278 = vmatprep.subr.mxu0 0.0
    %1279 = vmatpush2.xpose.msra.mxu0 0.0
    %1280 = vmatprep.subr.mxu0 0.0
    %1281 = vmatpush2.xpose.msra.mxu0 0.0
    %1282 = vmatprep.subr.mxu0 0.0
    %1283 = vmatpush2.xpose.msra.mxu0 0.0
    %1284 = vmatprep.subr.mxu0 0.0
    %1285 = vmatpush2.xpose.msra.mxu0 0.0
    %1286 = vmatprep.subr.mxu0 0.0
    %1287 = vmatpush2.xpose.msra.mxu0 0.0
    %1288 = vmatprep.subr.mxu0 0.0
    %1289 = vmatpush2.xpose.msra.mxu0 0.0
    %1290 = vmatprep.subr.mxu0 0.0
    %1291 = vmatpush2.xpose.msra.mxu0 0.0
    %1292 = vmatprep.subr.mxu0 0.0
    %1293 = vmatpush2.xpose.msra.mxu0 0.0
    %1294 = vmatprep.subr.mxu0 0.0
    %1295 = vmatpush2.xpose.msra.mxu0 0.0
    %1296 = vmatprep.subr.mxu0 0.0
    %1297 = vmatpush2.xpose.msra.mxu0 0.0
    %1298 = vmatprep.subr.mxu0 0.0
    %1299 = vmatpush2.xpose.msra.mxu0 0.0
    %1300 = vmatprep.subr.mxu0 0.0
    %1301 = vmatpush2.xpose.msra.mxu0 0.0
    %1302 = vmatprep.subr.mxu0 0.0
    %1303 = vmatpush2.xpose.msra.mxu0 0.0
    %1304 = vmatprep.subr.mxu0 0.0
    %1305 = vmatpush2.xpose.msra.mxu0 0.0
    %1306 = vmatprep.mubr.f32.mxu0 0.0
    %1307 = vmatmul.mubr.f32.gmra.mxu0 %v1238
    %v1308 = vpop.f32.mrf.mxu0
    %v1309 = vadd.f32 0.0, %v1308
    %v1310 = vpop.f32.mrf.mxu0
    %1311 = vdwg.mxu0
    %v1312 = vmul.f32 %v1309, 0.35355338
    %v1313 = vadd.f32 %v1312, %v22
    %v1314 = vsel %vm121, %v1313, -inf
    %1315 = vmax.xlane.f32.xlu0 %v1314
    %v1316 = vpop.xlane.xlu0 %1315
    %v1317 = vsub.f32 %v1313, %v1316
    %v1318 = vmul.f32 %v1317, 1.442695
    %v1319 = vpow.pop %v1318
    %v1320 = vsel %vm121, %v1319, 0.0
    %1321 = vadd.xlane.f32.xlu0 %v1320
    %v1322 = vpop.xlane.xlu0 %1321
    %v1323 = vrcp.pop %v1322
    %v1324 = vmul.f32 %v1319, %v1323
    %1325 = vrot.lane.b32.xlu0 %v1232, 64
    %v1326 = vpop.permute.xlu0 %1325
    %v1329 = vsel %vm121, %v1324, 0
    %1331 = vmatprep.subr.mxu0 0.0
    %1332 = vmatpush1.msra.mxu0 0.0
    %1333 = vmatprep.subr.mxu0 0.0
    %1334 = vmatpush1.msra.mxu0 0.0
    %1335 = vmatprep.subr.mxu0 0.0
    %1336 = vmatpush1.msra.mxu0 0.0
    %1337 = vmatprep.subr.mxu0 0.0
    %1338 = vmatpush1.msra.mxu0 0.0
    %1339 = vmatprep.subr.mxu0 0.0
    %1340 = vmatpush1.msra.mxu0 0.0
    %1341 = vmatprep.subr.mxu0 0.0
    %1342 = vmatpush1.msra.mxu0 0.0
    %1343 = vmatprep.subr.mxu0 0.0
    %1344 = vmatpush1.msra.mxu0 0.0
    %1345 = vmatprep.subr.mxu0 0.0
    %1346 = vmatpush1.msra.mxu0 0.0
    %1347 = vmatprep.subr.mxu0 0.0
    %1348 = vmatpush1.msra.mxu0 0.0
    %1349 = vmatprep.subr.mxu0 0.0
    %1350 = vmatpush1.msra.mxu0 0.0
    %1351 = vmatprep.subr.mxu0 0.0
    %1352 = vmatpush1.msra.mxu0 0.0
    %1353 = vmatprep.subr.mxu0 0.0
    %1354 = vmatpush1.msra.mxu0 0.0
    %1355 = vmatprep.subr.mxu0 0.0
    %1356 = vmatpush1.msra.mxu0 0.0
    %1357 = vmatprep.subr.mxu0 0.0
    %1358 = vmatpush1.msra.mxu0 0.0
    %1359 = vmatprep.subr.mxu0 0.0
    %1360 = vmatpush1.msra.mxu0 0.0
    %1361 = vmatprep.subr.mxu0 0.0
    %1362 = vmatpush1.msra.mxu0 %v1326
    %1363 = vmatprep.subr.mxu0 0.0
    %1364 = vmatpush2.msra.mxu0 0.0
    %1365 = vmatprep.subr.mxu0 0.0
    %1366 = vmatpush2.msra.mxu0 0.0
    %1367 = vmatprep.subr.mxu0 0.0
    %1368 = vmatpush2.msra.mxu0 0.0
    %1369 = vmatprep.subr.mxu0 0.0
    %1370 = vmatpush2.msra.mxu0 0.0
    %1371 = vmatprep.subr.mxu0 0.0
    %1372 = vmatpush2.msra.mxu0 0.0
    %1373 = vmatprep.subr.mxu0 0.0
    %1374 = vmatpush2.msra.mxu0 0.0
    %1375 = vmatprep.subr.mxu0 0.0
    %1376 = vmatpush2.msra.mxu0 0.0
    %1377 = vmatprep.subr.mxu0 0.0
    %1378 = vmatpush2.msra.mxu0 0.0
    %1379 = vmatprep.subr.mxu0 0.0
    %1380 = vmatpush2.msra.mxu0 0.0
    %1381 = vmatprep.subr.mxu0 0.0
    %1382 = vmatpush2.msra.mxu0 0.0
    %1383 = vmatprep.subr.mxu0 0.0
    %1384 = vmatpush2.msra.mxu0 0.0
    %1385 = vmatprep.subr.mxu0 0.0
    %1386 = vmatpush2.msra.mxu0 0.0
    %1387 = vmatprep.subr.mxu0 0.0
    %1388 = vmatpush2.msra.mxu0 0.0
    %1389 = vmatprep.subr.mxu0 0.0
    %1390 = vmatpush2.msra.mxu0 0.0
    %1391 = vmatprep.subr.mxu0 0.0
    %1392 = vmatpush2.msra.mxu0 0.0
    %1393 = vmatprep.subr.mxu0 0.0
    %1394 = vmatpush2.msra.mxu0 0.0
    %1395 = vmatprep.mubr.f32.mxu0 0.0
    %1396 = vmatmul.mubr.f32.gmra.mxu0 %v1329
    %v1397 = vpop.f32.mrf.mxu0
    %v1398 = vadd.f32 0.0, %v1397
    %v1399 = vpop.f32.mrf.mxu0
    %1400 = vdwg.mxu0
    %1401 = vrot.lane.b32.xlu0 %v1232, 120
    %v1402 = vpop.permute.xlu0 %1401
    %1403 = vrot.lane.b32.xlu0 %v1232, 88
    %v1404 = vpop.permute.xlu0 %1403
    %v1405 = vsel %vm121, %v1402, 0
    %v1407 = vsel %vm121, %v1404, 0
    %1409 = vmatprep.subr.mxu0 0.0
    %1410 = vmatpush1.xpose.msra.mxu0 0.0
    %1411 = vmatprep.subr.mxu0 0.0
    %1412 = vmatpush1.xpose.msra.mxu0 0.0
    %1413 = vmatprep.subr.mxu0 0.0
    %1414 = vmatpush1.xpose.msra.mxu0 0.0
    %1415 = vmatprep.subr.mxu0 0.0
    %1416 = vmatpush1.xpose.msra.mxu0 0.0
    %1417 = vmatprep.subr.mxu0 0.0
    %1418 = vmatpush1.xpose.msra.mxu0 0.0
    %1419 = vmatprep.subr.mxu0 0.0
    %1420 = vmatpush1.xpose.msra.mxu0 0.0
    %1421 = vmatprep.subr.mxu0 0.0
    %1422 = vmatpush1.xpose.msra.mxu0 0.0
    %1423 = vmatprep.subr.mxu0 0.0
    %1424 = vmatpush1.xpose.msra.mxu0 0.0
    %1425 = vmatprep.subr.mxu0 0.0
    %1426 = vmatpush1.xpose.msra.mxu0 0.0
    %1427 = vmatprep.subr.mxu0 0.0
    %1428 = vmatpush1.xpose.msra.mxu0 0.0
    %1429 = vmatprep.subr.mxu0 0.0
    %1430 = vmatpush1.xpose.msra.mxu0 0.0
    %1431 = vmatprep.subr.mxu0 0.0
    %1432 = vmatpush1.xpose.msra.mxu0 0.0
    %1433 = vmatprep.subr.mxu0 0.0
    %1434 = vmatpush1.xpose.msra.mxu0 0.0
    %1435 = vmatprep.subr.mxu0 0.0
    %1436 = vmatpush1.xpose.msra.mxu0 0.0
    %1437 = vmatprep.subr.mxu0 0.0
    %1438 = vmatpush1.xpose.msra.mxu0 0.0
    %1439 = vmatprep.subr.mxu0 0.0
    %1440 = vmatpush1.xpose.msra.mxu0 %v1407
    %1441 = vmatprep.subr.mxu0 0.0
    %1442 = vmatpush2.xpose.msra.mxu0 0.0
    %1443 = vmatprep.subr.mxu0 0.0
    %1444 = vmatpush2.xpose.msra.mxu0 0.0
    %1445 = vmatprep.subr.mxu0 0.0
    %1446 = vmatpush2.xpose.msra.mxu0 0.0
    %1447 = vmatprep.subr.mxu0 0.0
    %1448 = vmatpush2.xpose.msra.mxu0 0.0
    %1449 = vmatprep.subr.mxu0 0.0
    %1450 = vmatpush2.xpose.msra.mxu0 0.0
    %1451 = vmatprep.subr.mxu0 0.0
    %1452 = vmatpush2.xpose.msra.mxu0 0.0
    %1453 = vmatprep.subr.mxu0 0.0
    %1454 = vmatpush2.xpose.msra.mxu0 0.0
    %1455 = vmatprep.subr.mxu0 0.0
    %1456 = vmatpush2.xpose.msra.mxu0 0.0
    %1457 = vmatprep.subr.mxu0 0.0
    %1458 = vmatpush2.xpose.msra.mxu0 0.0
    %1459 = vmatprep.subr.mxu0 0.0
    %1460 = vmatpush2.xpose.msra.mxu0 0.0
    %1461 = vmatprep.subr.mxu0 0.0
    %1462 = vmatpush2.xpose.msra.mxu0 0.0
    %1463 = vmatprep.subr.mxu0 0.0
    %1464 = vmatpush2.xpose.msra.mxu0 0.0
    %1465 = vmatprep.subr.mxu0 0.0
    %1466 = vmatpush2.xpose.msra.mxu0 0.0
    %1467 = vmatprep.subr.mxu0 0.0
    %1468 = vmatpush2.xpose.msra.mxu0 0.0
    %1469 = vmatprep.subr.mxu0 0.0
    %1470 = vmatpush2.xpose.msra.mxu0 0.0
    %1471 = vmatprep.subr.mxu0 0.0
    %1472 = vmatpush2.xpose.msra.mxu0 0.0
    %1473 = vmatprep.mubr.f32.mxu0 0.0
    %1474 = vmatmul.mubr.f32.gmra.mxu0 %v1405
    %v1475 = vpop.f32.mrf.mxu0
    %v1476 = vadd.f32 0.0, %v1475
    %v1477 = vpop.f32.mrf.mxu0
    %1478 = vdwg.mxu0
    %v1479 = vmul.f32 %v1476, 0.35355338
    %v1480 = vadd.f32 %v1479, %v22
    %v1481 = vsel %vm121, %v1480, -inf
    %1482 = vmax.xlane.f32.xlu0 %v1481
    %v1483 = vpop.xlane.xlu0 %1482
    %v1484 = vsub.f32 %v1480, %v1483
    %v1485 = vmul.f32 %v1484, 1.442695
    %v1486 = vpow.pop %v1485
    %v1487 = vsel %vm121, %v1486, 0.0
    %1488 = vadd.xlane.f32.xlu0 %v1487
    %v1489 = vpop.xlane.xlu0 %1488
    %v1490 = vrcp.pop %v1489
    %v1491 = vmul.f32 %v1486, %v1490
    %1492 = vrot.lane.b32.xlu0 %v1232, 56
    %v1493 = vpop.permute.xlu0 %1492
    %v1496 = vsel %vm121, %v1491, 0
    %1498 = vmatprep.subr.mxu0 0.0
    %1499 = vmatpush1.msra.mxu0 0.0
    %1500 = vmatprep.subr.mxu0 0.0
    %1501 = vmatpush1.msra.mxu0 0.0
    %1502 = vmatprep.subr.mxu0 0.0
    %1503 = vmatpush1.msra.mxu0 0.0
    %1504 = vmatprep.subr.mxu0 0.0
    %1505 = vmatpush1.msra.mxu0 0.0
    %1506 = vmatprep.subr.mxu0 0.0
    %1507 = vmatpush1.msra.mxu0 0.0
    %1508 = vmatprep.subr.mxu0 0.0
    %1509 = vmatpush1.msra.mxu0 0.0
    %1510 = vmatprep.subr.mxu0 0.0
    %1511 = vmatpush1.msra.mxu0 0.0
    %1512 = vmatprep.subr.mxu0 0.0
    %1513 = vmatpush1.msra.mxu0 0.0
    %1514 = vmatprep.subr.mxu0 0.0
    %1515 = vmatpush1.msra.mxu0 0.0
    %1516 = vmatprep.subr.mxu0 0.0
    %1517 = vmatpush1.msra.mxu0 0.0
    %1518 = vmatprep.subr.mxu0 0.0
    %1519 = vmatpush1.msra.mxu0 0.0
    %1520 = vmatprep.subr.mxu0 0.0
    %1521 = vmatpush1.msra.mxu0 0.0
    %1522 = vmatprep.subr.mxu0 0.0
    %1523 = vmatpush1.msra.mxu0 0.0
    %1524 = vmatprep.subr.mxu0 0.0
    %1525 = vmatpush1.msra.mxu0 0.0
    %1526 = vmatprep.subr.mxu0 0.0
    %1527 = vmatpush1.msra.mxu0 0.0
    %1528 = vmatprep.subr.mxu0 0.0
    %1529 = vmatpush1.msra.mxu0 %v1493
    %1530 = vmatprep.subr.mxu0 0.0
    %1531 = vmatpush2.msra.mxu0 0.0
    %1532 = vmatprep.subr.mxu0 0.0
    %1533 = vmatpush2.msra.mxu0 0.0
    %1534 = vmatprep.subr.mxu0 0.0
    %1535 = vmatpush2.msra.mxu0 0.0
    %1536 = vmatprep.subr.mxu0 0.0
    %1537 = vmatpush2.msra.mxu0 0.0
    %1538 = vmatprep.subr.mxu0 0.0
    %1539 = vmatpush2.msra.mxu0 0.0
    %1540 = vmatprep.subr.mxu0 0.0
    %1541 = vmatpush2.msra.mxu0 0.0
    %1542 = vmatprep.subr.mxu0 0.0
    %1543 = vmatpush2.msra.mxu0 0.0
    %1544 = vmatprep.subr.mxu0 0.0
    %1545 = vmatpush2.msra.mxu0 0.0
    %1546 = vmatprep.subr.mxu0 0.0
    %1547 = vmatpush2.msra.mxu0 0.0
    %1548 = vmatprep.subr.mxu0 0.0
    %1549 = vmatpush2.msra.mxu0 0.0
    %1550 = vmatprep.subr.mxu0 0.0
    %1551 = vmatpush2.msra.mxu0 0.0
    %1552 = vmatprep.subr.mxu0 0.0
    %1553 = vmatpush2.msra.mxu0 0.0
    %1554 = vmatprep.subr.mxu0 0.0
    %1555 = vmatpush2.msra.mxu0 0.0
    %1556 = vmatprep.subr.mxu0 0.0
    %1557 = vmatpush2.msra.mxu0 0.0
    %1558 = vmatprep.subr.mxu0 0.0
    %1559 = vmatpush2.msra.mxu0 0.0
    %1560 = vmatprep.subr.mxu0 0.0
    %1561 = vmatpush2.msra.mxu0 0.0
    %1562 = vmatprep.mubr.f32.mxu0 0.0
    %1563 = vmatmul.mubr.f32.gmra.mxu0 %v1496
    %v1564 = vpop.f32.mrf.mxu0
    %v1565 = vadd.f32 0.0, %v1564
    %v1566 = vpop.f32.mrf.mxu0
    %1567 = vdwg.mxu0
    %1568 = vrot.lane.b32.xlu0 %v1232, 112
    %v1569 = vpop.permute.xlu0 %1568
    %1570 = vrot.lane.b32.xlu0 %v1232, 80
    %v1571 = vpop.permute.xlu0 %1570
    %v1572 = vsel %vm121, %v1569, 0
    %v1574 = vsel %vm121, %v1571, 0
    %1576 = vmatprep.subr.mxu0 0.0
    %1577 = vmatpush1.xpose.msra.mxu0 0.0
    %1578 = vmatprep.subr.mxu0 0.0
    %1579 = vmatpush1.xpose.msra.mxu0 0.0
    %1580 = vmatprep.subr.mxu0 0.0
    %1581 = vmatpush1.xpose.msra.mxu0 0.0
    %1582 = vmatprep.subr.mxu0 0.0
    %1583 = vmatpush1.xpose.msra.mxu0 0.0
    %1584 = vmatprep.subr.mxu0 0.0
    %1585 = vmatpush1.xpose.msra.mxu0 0.0
    %1586 = vmatprep.subr.mxu0 0.0
    %1587 = vmatpush1.xpose.msra.mxu0 0.0
    %1588 = vmatprep.subr.mxu0 0.0
    %1589 = vmatpush1.xpose.msra.mxu0 0.0
    %1590 = vmatprep.subr.mxu0 0.0
    %1591 = vmatpush1.xpose.msra.mxu0 0.0
    %1592 = vmatprep.subr.mxu0 0.0
    %1593 = vmatpush1.xpose.msra.mxu0 0.0
    %1594 = vmatprep.subr.mxu0 0.0
    %1595 = vmatpush1.xpose.msra.mxu0 0.0
    %1596 = vmatprep.subr.mxu0 0.0
    %1597 = vmatpush1.xpose.msra.mxu0 0.0
    %1598 = vmatprep.subr.mxu0 0.0
    %1599 = vmatpush1.xpose.msra.mxu0 0.0
    %1600 = vmatprep.subr.mxu0 0.0
    %1601 = vmatpush1.xpose.msra.mxu0 0.0
    %1602 = vmatprep.subr.mxu0 0.0
    %1603 = vmatpush1.xpose.msra.mxu0 0.0
    %1604 = vmatprep.subr.mxu0 0.0
    %1605 = vmatpush1.xpose.msra.mxu0 0.0
    %1606 = vmatprep.subr.mxu0 0.0
    %1607 = vmatpush1.xpose.msra.mxu0 %v1574
    %1608 = vmatprep.subr.mxu0 0.0
    %1609 = vmatpush2.xpose.msra.mxu0 0.0
    %1610 = vmatprep.subr.mxu0 0.0
    %1611 = vmatpush2.xpose.msra.mxu0 0.0
    %1612 = vmatprep.subr.mxu0 0.0
    %1613 = vmatpush2.xpose.msra.mxu0 0.0
    %1614 = vmatprep.subr.mxu0 0.0
    %1615 = vmatpush2.xpose.msra.mxu0 0.0
    %1616 = vmatprep.subr.mxu0 0.0
    %1617 = vmatpush2.xpose.msra.mxu0 0.0
    %1618 = vmatprep.subr.mxu0 0.0
    %1619 = vmatpush2.xpose.msra.mxu0 0.0
    %1620 = vmatprep.subr.mxu0 0.0
    %1621 = vmatpush2.xpose.msra.mxu0 0.0
    %1622 = vmatprep.subr.mxu0 0.0
    %1623 = vmatpush2.xpose.msra.mxu0 0.0
    %1624 = vmatprep.subr.mxu0 0.0
    %1625 = vmatpush2.xpose.msra.mxu0 0.0
    %1626 = vmatprep.subr.mxu0 0.0
    %1627 = vmatpush2.xpose.msra.mxu0 0.0
    %1628 = vmatprep.subr.mxu0 0.0
    %1629 = vmatpush2.xpose.msra.mxu0 0.0
    %1630 = vmatprep.subr.mxu0 0.0
    %1631 = vmatpush2.xpose.msra.mxu0 0.0
    %1632 = vmatprep.subr.mxu0 0.0
    %1633 = vmatpush2.xpose.msra.mxu0 0.0
    %1634 = vmatprep.subr.mxu0 0.0
    %1635 = vmatpush2.xpose.msra.mxu0 0.0
    %1636 = vmatprep.subr.mxu0 0.0
    %1637 = vmatpush2.xpose.msra.mxu0 0.0
    %1638 = vmatprep.subr.mxu0 0.0
    %1639 = vmatpush2.xpose.msra.mxu0 0.0
    %1640 = vmatprep.mubr.f32.mxu0 0.0
    %1641 = vmatmul.mubr.f32.gmra.mxu0 %v1572
    %v1642 = vpop.f32.mrf.mxu0
    %v1643 = vadd.f32 0.0, %v1642
    %v1644 = vpop.f32.mrf.mxu0
    %1645 = vdwg.mxu0
    %v1646 = vmul.f32 %v1643, 0.35355338
    %v1647 = vadd.f32 %v1646, %v22
    %v1648 = vsel %vm121, %v1647, -inf
    %1649 = vmax.xlane.f32.xlu0 %v1648
    %v1650 = vpop.xlane.xlu0 %1649
    %v1651 = vsub.f32 %v1647, %v1650
    %v1652 = vmul.f32 %v1651, 1.442695
    %v1653 = vpow.pop %v1652
    %v1654 = vsel %vm121, %v1653, 0.0
    %1655 = vadd.xlane.f32.xlu0 %v1654
    %v1656 = vpop.xlane.xlu0 %1655
    %v1657 = vrcp.pop %v1656
    %v1658 = vmul.f32 %v1653, %v1657
    %1659 = vrot.lane.b32.xlu0 %v1232, 48
    %v1660 = vpop.permute.xlu0 %1659
    %v1663 = vsel %vm121, %v1658, 0
    %1665 = vmatprep.subr.mxu0 0.0
    %1666 = vmatpush1.msra.mxu0 0.0
    %1667 = vmatprep.subr.mxu0 0.0
    %1668 = vmatpush1.msra.mxu0 0.0
    %1669 = vmatprep.subr.mxu0 0.0
    %1670 = vmatpush1.msra.mxu0 0.0
    %1671 = vmatprep.subr.mxu0 0.0
    %1672 = vmatpush1.msra.mxu0 0.0
    %1673 = vmatprep.subr.mxu0 0.0
    %1674 = vmatpush1.msra.mxu0 0.0
    %1675 = vmatprep.subr.mxu0 0.0
    %1676 = vmatpush1.msra.mxu0 0.0
    %1677 = vmatprep.subr.mxu0 0.0
    %1678 = vmatpush1.msra.mxu0 0.0
    %1679 = vmatprep.subr.mxu0 0.0
    %1680 = vmatpush1.msra.mxu0 0.0
    %1681 = vmatprep.subr.mxu0 0.0
    %1682 = vmatpush1.msra.mxu0 0.0
    %1683 = vmatprep.subr.mxu0 0.0
    %1684 = vmatpush1.msra.mxu0 0.0
    %1685 = vmatprep.subr.mxu0 0.0
    %1686 = vmatpush1.msra.mxu0 0.0
    %1687 = vmatprep.subr.mxu0 0.0
    %1688 = vmatpush1.msra.mxu0 0.0
    %1689 = vmatprep.subr.mxu0 0.0
    %1690 = vmatpush1.msra.mxu0 0.0
    %1691 = vmatprep.subr.mxu0 0.0
    %1692 = vmatpush1.msra.mxu0 0.0
    %1693 = vmatprep.subr.mxu0 0.0
    %1694 = vmatpush1.msra.mxu0 0.0
    %1695 = vmatprep.subr.mxu0 0.0
    %1696 = vmatpush1.msra.mxu0 %v1660
    %1697 = vmatprep.subr.mxu0 0.0
    %1698 = vmatpush2.msra.mxu0 0.0
    %1699 = vmatprep.subr.mxu0 0.0
    %1700 = vmatpush2.msra.mxu0 0.0
    %1701 = vmatprep.subr.mxu0 0.0
    %1702 = vmatpush2.msra.mxu0 0.0
    %1703 = vmatprep.subr.mxu0 0.0
    %1704 = vmatpush2.msra.mxu0 0.0
    %1705 = vmatprep.subr.mxu0 0.0
    %1706 = vmatpush2.msra.mxu0 0.0
    %1707 = vmatprep.subr.mxu0 0.0
    %1708 = vmatpush2.msra.mxu0 0.0
    %1709 = vmatprep.subr.mxu0 0.0
    %1710 = vmatpush2.msra.mxu0 0.0
    %1711 = vmatprep.subr.mxu0 0.0
    %1712 = vmatpush2.msra.mxu0 0.0
    %1713 = vmatprep.subr.mxu0 0.0
    %1714 = vmatpush2.msra.mxu0 0.0
    %1715 = vmatprep.subr.mxu0 0.0
    %1716 = vmatpush2.msra.mxu0 0.0
    %1717 = vmatprep.subr.mxu0 0.0
    %1718 = vmatpush2.msra.mxu0 0.0
    %1719 = vmatprep.subr.mxu0 0.0
    %1720 = vmatpush2.msra.mxu0 0.0
    %1721 = vmatprep.subr.mxu0 0.0
    %1722 = vmatpush2.msra.mxu0 0.0
    %1723 = vmatprep.subr.mxu0 0.0
    %1724 = vmatpush2.msra.mxu0 0.0
    %1725 = vmatprep.subr.mxu0 0.0
    %1726 = vmatpush2.msra.mxu0 0.0
    %1727 = vmatprep.subr.mxu0 0.0
    %1728 = vmatpush2.msra.mxu0 0.0
    %1729 = vmatprep.mubr.f32.mxu0 0.0
    %1730 = vmatmul.mubr.f32.gmra.mxu0 %v1663
    %v1731 = vpop.f32.mrf.mxu0
    %v1732 = vadd.f32 0.0, %v1731
    %v1733 = vpop.f32.mrf.mxu0
    %1734 = vdwg.mxu0
    %1735 = vrot.lane.b32.xlu0 %v1232, 104
    %v1736 = vpop.permute.xlu0 %1735
    %1737 = vrot.lane.b32.xlu0 %v1232, 72
    %v1738 = vpop.permute.xlu0 %1737
    %v1739 = vsel %vm121, %v1736, 0
    %v1741 = vsel %vm121, %v1738, 0
    %1743 = vmatprep.subr.mxu0 0.0
    %1744 = vmatpush1.xpose.msra.mxu0 0.0
    %1745 = vmatprep.subr.mxu0 0.0
    %1746 = vmatpush1.xpose.msra.mxu0 0.0
    %1747 = vmatprep.subr.mxu0 0.0
    %1748 = vmatpush1.xpose.msra.mxu0 0.0
    %1749 = vmatprep.subr.mxu0 0.0
    %1750 = vmatpush1.xpose.msra.mxu0 0.0
    %1751 = vmatprep.subr.mxu0 0.0
    %1752 = vmatpush1.xpose.msra.mxu0 0.0
    %1753 = vmatprep.subr.mxu0 0.0
    %1754 = vmatpush1.xpose.msra.mxu0 0.0
    %1755 = vmatprep.subr.mxu0 0.0
    %1756 = vmatpush1.xpose.msra.mxu0 0.0
    %1757 = vmatprep.subr.mxu0 0.0
    %1758 = vmatpush1.xpose.msra.mxu0 0.0
    %1759 = vmatprep.subr.mxu0 0.0
    %1760 = vmatpush1.xpose.msra.mxu0 0.0
    %1761 = vmatprep.subr.mxu0 0.0
    %1762 = vmatpush1.xpose.msra.mxu0 0.0
    %1763 = vmatprep.subr.mxu0 0.0
    %1764 = vmatpush1.xpose.msra.mxu0 0.0
    %1765 = vmatprep.subr.mxu0 0.0
    %1766 = vmatpush1.xpose.msra.mxu0 0.0
    %1767 = vmatprep.subr.mxu0 0.0
    %1768 = vmatpush1.xpose.msra.mxu0 0.0
    %1769 = vmatprep.subr.mxu0 0.0
    %1770 = vmatpush1.xpose.msra.mxu0 0.0
    %1771 = vmatprep.subr.mxu0 0.0
    %1772 = vmatpush1.xpose.msra.mxu0 0.0
    %1773 = vmatprep.subr.mxu0 0.0
    %1774 = vmatpush1.xpose.msra.mxu0 %v1741
    %1775 = vmatprep.subr.mxu0 0.0
    %1776 = vmatpush2.xpose.msra.mxu0 0.0
    %1777 = vmatprep.subr.mxu0 0.0
    %1778 = vmatpush2.xpose.msra.mxu0 0.0
    %1779 = vmatprep.subr.mxu0 0.0
    %1780 = vmatpush2.xpose.msra.mxu0 0.0
    %1781 = vmatprep.subr.mxu0 0.0
    %1782 = vmatpush2.xpose.msra.mxu0 0.0
    %1783 = vmatprep.subr.mxu0 0.0
    %1784 = vmatpush2.xpose.msra.mxu0 0.0
    %1785 = vmatprep.subr.mxu0 0.0
    %1786 = vmatpush2.xpose.msra.mxu0 0.0
    %1787 = vmatprep.subr.mxu0 0.0
    %1788 = vmatpush2.xpose.msra.mxu0 0.0
    %1789 = vmatprep.subr.mxu0 0.0
    %1790 = vmatpush2.xpose.msra.mxu0 0.0
    %1791 = vmatprep.subr.mxu0 0.0
    %1792 = vmatpush2.xpose.msra.mxu0 0.0
    %1793 = vmatprep.subr.mxu0 0.0
    %1794 = vmatpush2.xpose.msra.mxu0 0.0
    %1795 = vmatprep.subr.mxu0 0.0
    %1796 = vmatpush2.xpose.msra.mxu0 0.0
    %1797 = vmatprep.subr.mxu0 0.0
    %1798 = vmatpush2.xpose.msra.mxu0 0.0
    %1799 = vmatprep.subr.mxu0 0.0
    %1800 = vmatpush2.xpose.msra.mxu0 0.0
    %1801 = vmatprep.subr.mxu0 0.0
    %1802 = vmatpush2.xpose.msra.mxu0 0.0
    %1803 = vmatprep.subr.mxu0 0.0
    %1804 = vmatpush2.xpose.msra.mxu0 0.0
    %1805 = vmatprep.subr.mxu0 0.0
    %1806 = vmatpush2.xpose.msra.mxu0 0.0
    %1807 = vmatprep.mubr.f32.mxu0 0.0
    %1808 = vmatmul.mubr.f32.gmra.mxu0 %v1739
    %v1809 = vpop.f32.mrf.mxu0
    %v1810 = vadd.f32 0.0, %v1809
    %v1811 = vpop.f32.mrf.mxu0
    %1812 = vdwg.mxu0
    %v1813 = vmul.f32 %v1810, 0.35355338
    %v1814 = vadd.f32 %v1813, %v22
    %v1815 = vsel %vm121, %v1814, -inf
    %1816 = vmax.xlane.f32.xlu0 %v1815
    %v1817 = vpop.xlane.xlu0 %1816
    %v1818 = vsub.f32 %v1814, %v1817
    %v1819 = vmul.f32 %v1818, 1.442695
    %v1820 = vpow.pop %v1819
    %v1821 = vsel %vm121, %v1820, 0.0
    %1822 = vadd.xlane.f32.xlu0 %v1821
    %v1823 = vpop.xlane.xlu0 %1822
    %v1824 = vrcp.pop %v1823
    %v1825 = vmul.f32 %v1820, %v1824
    %1826 = vrot.lane.b32.xlu0 %v1232, 40
    %v1827 = vpop.permute.xlu0 %1826
    %v1830 = vsel %vm121, %v1825, 0
    %1832 = vmatprep.subr.mxu0 0.0
    %1833 = vmatpush1.msra.mxu0 0.0
    %1834 = vmatprep.subr.mxu0 0.0
    %1835 = vmatpush1.msra.mxu0 0.0
    %1836 = vmatprep.subr.mxu0 0.0
    %1837 = vmatpush1.msra.mxu0 0.0
    %1838 = vmatprep.subr.mxu0 0.0
    %1839 = vmatpush1.msra.mxu0 0.0
    %1840 = vmatprep.subr.mxu0 0.0
    %1841 = vmatpush1.msra.mxu0 0.0
    %1842 = vmatprep.subr.mxu0 0.0
    %1843 = vmatpush1.msra.mxu0 0.0
    %1844 = vmatprep.subr.mxu0 0.0
    %1845 = vmatpush1.msra.mxu0 0.0
    %1846 = vmatprep.subr.mxu0 0.0
    %1847 = vmatpush1.msra.mxu0 0.0
    %1848 = vmatprep.subr.mxu0 0.0
    %1849 = vmatpush1.msra.mxu0 0.0
    %1850 = vmatprep.subr.mxu0 0.0
    %1851 = vmatpush1.msra.mxu0 0.0
    %1852 = vmatprep.subr.mxu0 0.0
    %1853 = vmatpush1.msra.mxu0 0.0
    %1854 = vmatprep.subr.mxu0 0.0
    %1855 = vmatpush1.msra.mxu0 0.0
    %1856 = vmatprep.subr.mxu0 0.0
    %1857 = vmatpush1.msra.mxu0 0.0
    %1858 = vmatprep.subr.mxu0 0.0
    %1859 = vmatpush1.msra.mxu0 0.0
    %1860 = vmatprep.subr.mxu0 0.0
    %1861 = vmatpush1.msra.mxu0 0.0
    %1862 = vmatprep.subr.mxu0 0.0
    %1863 = vmatpush1.msra.mxu0 %v1827
    %1864 = vmatprep.subr.mxu0 0.0
    %1865 = vmatpush2.msra.mxu0 0.0
    %1866 = vmatprep.subr.mxu0 0.0
    %1867 = vmatpush2.msra.mxu0 0.0
    %1868 = vmatprep.subr.mxu0 0.0
    %1869 = vmatpush2.msra.mxu0 0.0
    %1870 = vmatprep.subr.mxu0 0.0
    %1871 = vmatpush2.msra.mxu0 0.0
    %1872 = vmatprep.subr.mxu0 0.0
    %1873 = vmatpush2.msra.mxu0 0.0
    %1874 = vmatprep.subr.mxu0 0.0
    %1875 = vmatpush2.msra.mxu0 0.0
    %1876 = vmatprep.subr.mxu0 0.0
    %1877 = vmatpush2.msra.mxu0 0.0
    %1878 = vmatprep.subr.mxu0 0.0
    %1879 = vmatpush2.msra.mxu0 0.0
    %1880 = vmatprep.subr.mxu0 0.0
    %1881 = vmatpush2.msra.mxu0 0.0
    %1882 = vmatprep.subr.mxu0 0.0
    %1883 = vmatpush2.msra.mxu0 0.0
    %1884 = vmatprep.subr.mxu0 0.0
    %1885 = vmatpush2.msra.mxu0 0.0
    %1886 = vmatprep.subr.mxu0 0.0
    %1887 = vmatpush2.msra.mxu0 0.0
    %1888 = vmatprep.subr.mxu0 0.0
    %1889 = vmatpush2.msra.mxu0 0.0
    %1890 = vmatprep.subr.mxu0 0.0
    %1891 = vmatpush2.msra.mxu0 0.0
    %1892 = vmatprep.subr.mxu0 0.0
    %1893 = vmatpush2.msra.mxu0 0.0
    %1894 = vmatprep.subr.mxu0 0.0
    %1895 = vmatpush2.msra.mxu0 0.0
    %1896 = vmatprep.mubr.f32.mxu0 0.0
    %1897 = vmatmul.mubr.f32.gmra.mxu0 %v1830
    %v1898 = vpop.f32.mrf.mxu0
    %v1899 = vadd.f32 0.0, %v1898
    %v1900 = vpop.f32.mrf.mxu0
    %1901 = vdwg.mxu0
    %1903 = vrot.lane.b32.xlu0 %v1565, 8
    %v1904 = vpop.permute.xlu0 %1903
    %1907 = vrot.lane.b32.xlu0 %v1732, 16
    %v1908 = vpop.permute.xlu0 %1907
    %1911 = vrot.lane.b32.xlu0 %v1899, 24
    %v1912 = vpop.permute.xlu0 %1911
    %v1914 = vsel %vm121, %v1398, %v1904
    %v1915 = vsel %vm799, %v1914, %v1908
    %v1916 = vsel %vm801, %v1915, %v1912
    %v1918 = vsel %vm44, %v1916, 0
    %1920 = vmatprep.subr.mxu0 0.0
    %1921 = vmatpush1.msra.mxu0 0.0
    %1922 = vmatprep.subr.mxu0 0.0
    %1923 = vmatpush1.msra.mxu0 0.0
    %1924 = vmatprep.subr.mxu0 0.0
    %1925 = vmatpush1.msra.mxu0 0.0
    %1926 = vmatprep.subr.mxu0 0.0
    %1927 = vmatpush1.msra.mxu0 0.0
    %1928 = vmatprep.subr.mxu0 0.0
    %1929 = vmatpush1.msra.mxu0 0.0
    %1930 = vmatprep.subr.mxu0 0.0
    %1931 = vmatpush1.msra.mxu0 0.0
    %1932 = vmatprep.subr.mxu0 0.0
    %1933 = vmatpush1.msra.mxu0 0.0
    %1934 = vmatprep.subr.mxu0 0.0
    %1935 = vmatpush1.msra.mxu0 0.0
    %1936 = vmatprep.subr.mxu0 0.0
    %1937 = vmatpush1.msra.mxu0 0.0
    %1938 = vmatprep.subr.mxu0 0.0
    %1939 = vmatpush1.msra.mxu0 0.0
    %1940 = vmatprep.subr.mxu0 0.0
    %1941 = vmatpush1.msra.mxu0 0.0
    %1942 = vmatprep.subr.mxu0 0.0
    %1943 = vmatpush1.msra.mxu0 0.0
    %1944 = vmatprep.subr.mxu0 0.0
    %1945 = vmatpush1.msra.mxu0 %v1159
    %1946 = vmatprep.subr.mxu0 0.0
    %1947 = vmatpush1.msra.mxu0 %v1158
    %1948 = vmatprep.subr.mxu0 0.0
    %1949 = vmatpush1.msra.mxu0 %v1157
    %1950 = vmatprep.subr.mxu0 0.0
    %1951 = vmatpush1.msra.mxu0 %v1156
    %1952 = vmatprep.subr.mxu0 0.0
    %1953 = vmatpush2.msra.mxu0 0.0
    %1954 = vmatprep.subr.mxu0 0.0
    %1955 = vmatpush2.msra.mxu0 0.0
    %1956 = vmatprep.subr.mxu0 0.0
    %1957 = vmatpush2.msra.mxu0 0.0
    %1958 = vmatprep.subr.mxu0 0.0
    %1959 = vmatpush2.msra.mxu0 0.0
    %1960 = vmatprep.subr.mxu0 0.0
    %1961 = vmatpush2.msra.mxu0 0.0
    %1962 = vmatprep.subr.mxu0 0.0
    %1963 = vmatpush2.msra.mxu0 0.0
    %1964 = vmatprep.subr.mxu0 0.0
    %1965 = vmatpush2.msra.mxu0 0.0
    %1966 = vmatprep.subr.mxu0 0.0
    %1967 = vmatpush2.msra.mxu0 0.0
    %1968 = vmatprep.subr.mxu0 0.0
    %1969 = vmatpush2.msra.mxu0 0.0
    %1970 = vmatprep.subr.mxu0 0.0
    %1971 = vmatpush2.msra.mxu0 0.0
    %1972 = vmatprep.subr.mxu0 0.0
    %1973 = vmatpush2.msra.mxu0 0.0
    %1974 = vmatprep.subr.mxu0 0.0
    %1975 = vmatpush2.msra.mxu0 0.0
    %1976 = vmatprep.subr.mxu0 0.0
    %1977 = vmatpush2.msra.mxu0 0.0
    %1978 = vmatprep.subr.mxu0 0.0
    %1979 = vmatpush2.msra.mxu0 0.0
    %1980 = vmatprep.subr.mxu0 0.0
    %1981 = vmatpush2.msra.mxu0 0.0
    %1982 = vmatprep.subr.mxu0 0.0
    %1983 = vmatpush2.msra.mxu0 0.0
    %1984 = vmatprep.mubr.f32.mxu0 0.0
    %1985 = vmatmul.mubr.f32.gmra.mxu0 %v1918
    %v1986 = vpop.f32.mrf.mxu0
    %v1987 = vadd.f32 0.0, %v1986
    %v1988 = vpop.f32.mrf.mxu0
    %1989 = vdwg.mxu0
    %v1990 = vadd.f32 %v1137, %v1987
    %v1991 = vsel %vm44, %v1990, 0.0
    %1992 = vadd.xlane.f32.xlu0 %v1991
    %v1993 = vpop.xlane.xlu0 %1992
    %v1994 = vmul.f32 %v1993, %v880
    %v1995 = vsub.f32 %v1990, %v1994
    %v1996 = vmul.f32 %v1995, %v1995
    %v1997 = vsel %vm44, %v1996, 0.0
    %1998 = vadd.xlane.f32.xlu0 %v1997
    %v1999 = vpop.xlane.xlu0 %1998
    %v2000 = vmul.f32 %v1999, %v880
    %v2001 = vadd.f32 %v2000, 1e-05
    %v2002 = vrsqrt.pop %v2001
    %v2003 = vmul.f32 %v1995, %v2002
    %v2004 = vlaneseq
    %v2005 = vshrl.u32 %v2004, 7
    %v2006 = vsub.s32 2, %v2005
    %v2007 = vrot.slane %v1161, %v2006
    %v2008 = vmul.f32 %v2003, %v2007
    %v2009 = vlaneseq
    %v2010 = vshrl.u32 %v2009, 7
    %v2011 = vsub.s32 3, %v2010
    %v2012 = vrot.slane %v1161, %v2011
    %v2013 = vadd.f32 %v2008, %v2012
    %v2014 = vlaneseq
    %v2015 = vshrl.u32 %v2014, 7
    %v2016 = vsub.s32 0, %v2015
    %v2017 = vrot.slane %v1161, %v2016
    %2026 = vrot.lane.b32.xlu0 %v1139, 32
    %v2027 = vpop.permute.xlu0 %2026
    %2028 = vrot.lane.b32.xlu0 %v1140, 32
    %v2029 = vpop.permute.xlu0 %2028
    %2030 = vrot.lane.b32.xlu0 %v1141, 32
    %v2031 = vpop.permute.xlu0 %2030
    %2032 = vrot.lane.b32.xlu0 %v1142, 32
    %v2033 = vpop.permute.xlu0 %2032
    %2034 = vrot.lane.b32.xlu0 %v1143, 32
    %v2035 = vpop.permute.xlu0 %2034
    %2036 = vrot.lane.b32.xlu0 %v1144, 32
    %v2037 = vpop.permute.xlu0 %2036
    %2038 = vrot.lane.b32.xlu0 %v1145, 32
    %v2039 = vpop.permute.xlu0 %2038
    %2040 = vrot.lane.b32.xlu0 %v1146, 32
    %v2041 = vpop.permute.xlu0 %2040
    %v2042 = vsel %vm44, %v2027, %v2029
    %v2043 = vsel %vm44, %v2031, %v2033
    %v2044 = vsel %vm44, %v2035, %v2037
    %v2045 = vsel %vm44, %v2039, %v2041
    %v2051 = vsel %vm44, %v2013, 0
    %2053 = vmatprep.subr.mxu0 0.0
    %2054 = vmatpush1.msra.mxu0 0.0
    %2055 = vmatprep.subr.mxu0 0.0
    %2056 = vmatpush1.msra.mxu0 0.0
    %2057 = vmatprep.subr.mxu0 0.0
    %2058 = vmatpush1.msra.mxu0 0.0
    %2059 = vmatprep.subr.mxu0 0.0
    %2060 = vmatpush1.msra.mxu0 0.0
    %2061 = vmatprep.subr.mxu0 0.0
    %2062 = vmatpush1.msra.mxu0 0.0
    %2063 = vmatprep.subr.mxu0 0.0
    %2064 = vmatpush1.msra.mxu0 0.0
    %2065 = vmatprep.subr.mxu0 0.0
    %2066 = vmatpush1.msra.mxu0 0.0
    %2067 = vmatprep.subr.mxu0 0.0
    %2068 = vmatpush1.msra.mxu0 0.0
    %2069 = vmatprep.subr.mxu0 0.0
    %2070 = vmatpush1.msra.mxu0 0.0
    %2071 = vmatprep.subr.mxu0 0.0
    %2072 = vmatpush1.msra.mxu0 0.0
    %2073 = vmatprep.subr.mxu0 0.0
    %2074 = vmatpush1.msra.mxu0 0.0
    %2075 = vmatprep.subr.mxu0 0.0
    %2076 = vmatpush1.msra.mxu0 0.0
    %2077 = vmatprep.subr.mxu0 0.0
    %2078 = vmatpush1.msra.mxu0 %v2045
    %2079 = vmatprep.subr.mxu0 0.0
    %2080 = vmatpush1.msra.mxu0 %v2044
    %2081 = vmatprep.subr.mxu0 0.0
    %2082 = vmatpush1.msra.mxu0 %v2043
    %2083 = vmatprep.subr.mxu0 0.0
    %2084 = vmatpush1.msra.mxu0 %v2042
    %2085 = vmatprep.subr.mxu0 0.0
    %2086 = vmatpush2.msra.mxu0 0.0
    %2087 = vmatprep.subr.mxu0 0.0
    %2088 = vmatpush2.msra.mxu0 0.0
    %2089 = vmatprep.subr.mxu0 0.0
    %2090 = vmatpush2.msra.mxu0 0.0
    %2091 = vmatprep.subr.mxu0 0.0
    %2092 = vmatpush2.msra.mxu0 0.0
    %2093 = vmatprep.subr.mxu0 0.0
    %2094 = vmatpush2.msra.mxu0 0.0
    %2095 = vmatprep.subr.mxu0 0.0
    %2096 = vmatpush2.msra.mxu0 0.0
    %2097 = vmatprep.subr.mxu0 0.0
    %2098 = vmatpush2.msra.mxu0 0.0
    %2099 = vmatprep.subr.mxu0 0.0
    %2100 = vmatpush2.msra.mxu0 0.0
    %2101 = vmatprep.subr.mxu0 0.0
    %2102 = vmatpush2.msra.mxu0 0.0
    %2103 = vmatprep.subr.mxu0 0.0
    %2104 = vmatpush2.msra.mxu0 0.0
    %2105 = vmatprep.subr.mxu0 0.0
    %2106 = vmatpush2.msra.mxu0 0.0
    %2107 = vmatprep.subr.mxu0 0.0
    %2108 = vmatpush2.msra.mxu0 0.0
    %2109 = vmatprep.subr.mxu0 0.0
    %2110 = vmatpush2.msra.mxu0 0.0
    %2111 = vmatprep.subr.mxu0 0.0
    %2112 = vmatpush2.msra.mxu0 0.0
    %2113 = vmatprep.subr.mxu0 0.0
    %2114 = vmatpush2.msra.mxu0 0.0
    %2115 = vmatprep.subr.mxu0 0.0
    %2116 = vmatpush2.msra.mxu0 0.0
    %2117 = vmatprep.mubr.f32.mxu0 0.0
    %2118 = vmatmul.mubr.f32.gmra.mxu0 %v2051
    %v2119 = vpop.f32.mrf.mxu0
    %v2120 = vadd.f32 %v2017, %v2119
    %v2121 = vpop.f32.mrf.mxu0
    %2122 = vdwg.mxu0
    %v2123 = vmul.f32 %v2120, 0.5
    %v2124 = vmul.f32 %v2120, 0.70710677
    %vm2125 = vcmp.ge.f32.partialorder %v2124, 0.0
    %v2126 = vsel %vm2125, 1.0, -1.0
    %v2127 = vand.u32 2147483647, %v2124
    %v2128 = vmul.f32 %v2127, 0.3275911
    %v2129 = vadd.f32 %v2128, 1.0
    %v2130 = vrcp.pop %v2129
    %v2131 = vmul.f32 %v2130, 1.0614054
    %v2132 = vadd.f32 %v2131, -1.4531521
    %v2133 = vmul.f32 %v2130, %v2132
    %v2134 = vadd.f32 %v2133, 1.4214138
    %v2135 = vmul.f32 %v2130, %v2134
    %v2136 = vadd.f32 %v2135, -0.28449672
    %v2137 = vmul.f32 %v2130, %v2136
    %v2138 = vadd.f32 %v2137, 0.2548296
    %v2139 = vmul.f32 %v2130, %v2138
    %v2140 = vsub.f32 0.0, %v2127
    %v2141 = vmul.f32 %v2140, %v2127
    %v2142 = vmul.f32 %v2141, 1.442695
    %v2143 = vpow.pop %v2142
    %v2144 = vmul.f32 %v2139, %v2143
    %v2145 = vsub.f32 1.0, %v2144
    %v2146 = vmul.f32 %v2126, %v2145
    %v2147 = vadd.f32 %v2146, 1.0
    %v2148 = vmul.f32 %v2123, %v2147
    %v2149 = vlaneseq
    %v2150 = vshrl.u32 %v2149, 7
    %v2151 = vsub.s32 1, %v2150
    %v2152 = vrot.slane %v1161, %v2151
    %v2154 = vsel %vm1040, %v2148, 0
    %2156 = vmatprep.subr.mxu0 0.0
    %2157 = vmatpush1.msra.mxu0 0.0
    %2158 = vmatprep.subr.mxu0 0.0
    %2159 = vmatpush1.msra.mxu0 0.0
    %2160 = vmatprep.subr.mxu0 0.0
    %2161 = vmatpush1.msra.mxu0 0.0
    %2162 = vmatprep.subr.mxu0 0.0
    %2163 = vmatpush1.msra.mxu0 0.0
    %2164 = vmatprep.subr.mxu0 0.0
    %2165 = vmatpush1.msra.mxu0 0.0
    %2166 = vmatprep.subr.mxu0 0.0
    %2167 = vmatpush1.msra.mxu0 0.0
    %2168 = vmatprep.subr.mxu0 0.0
    %2169 = vmatpush1.msra.mxu0 0.0
    %2170 = vmatprep.subr.mxu0 0.0
    %2171 = vmatpush1.msra.mxu0 0.0
    %2172 = vmatprep.subr.mxu0 0.0
    %2173 = vmatpush1.msra.mxu0 %v1155
    %2174 = vmatprep.subr.mxu0 0.0
    %2175 = vmatpush1.msra.mxu0 %v1154
    %2176 = vmatprep.subr.mxu0 0.0
    %2177 = vmatpush1.msra.mxu0 %v1153
    %2178 = vmatprep.subr.mxu0 0.0
    %2179 = vmatpush1.msra.mxu0 %v1152
    %2180 = vmatprep.subr.mxu0 0.0
    %2181 = vmatpush1.msra.mxu0 %v1151
    %2182 = vmatprep.subr.mxu0 0.0
    %2183 = vmatpush1.msra.mxu0 %v1150
    %2184 = vmatprep.subr.mxu0 0.0
    %2185 = vmatpush1.msra.mxu0 %v1149
    %2186 = vmatprep.subr.mxu0 0.0
    %2187 = vmatpush1.msra.mxu0 %v1148
    %2188 = vmatprep.subr.mxu0 0.0
    %2189 = vmatpush2.msra.mxu0 0.0
    %2190 = vmatprep.subr.mxu0 0.0
    %2191 = vmatpush2.msra.mxu0 0.0
    %2192 = vmatprep.subr.mxu0 0.0
    %2193 = vmatpush2.msra.mxu0 0.0
    %2194 = vmatprep.subr.mxu0 0.0
    %2195 = vmatpush2.msra.mxu0 0.0
    %2196 = vmatprep.subr.mxu0 0.0
    %2197 = vmatpush2.msra.mxu0 0.0
    %2198 = vmatprep.subr.mxu0 0.0
    %2199 = vmatpush2.msra.mxu0 0.0
    %2200 = vmatprep.subr.mxu0 0.0
    %2201 = vmatpush2.msra.mxu0 0.0
    %2202 = vmatprep.subr.mxu0 0.0
    %2203 = vmatpush2.msra.mxu0 0.0
    %2204 = vmatprep.subr.mxu0 0.0
    %2205 = vmatpush2.msra.mxu0 0.0
    %2206 = vmatprep.subr.mxu0 0.0
    %2207 = vmatpush2.msra.mxu0 0.0
    %2208 = vmatprep.subr.mxu0 0.0
    %2209 = vmatpush2.msra.mxu0 0.0
    %2210 = vmatprep.subr.mxu0 0.0
    %2211 = vmatpush2.msra.mxu0 0.0
    %2212 = vmatprep.subr.mxu0 0.0
    %2213 = vmatpush2.msra.mxu0 0.0
    %2214 = vmatprep.subr.mxu0 0.0
    %2215 = vmatpush2.msra.mxu0 0.0
    %2216 = vmatprep.subr.mxu0 0.0
    %2217 = vmatpush2.msra.mxu0 0.0
    %2218 = vmatprep.subr.mxu0 0.0
    %2219 = vmatpush2.msra.mxu0 0.0
    %2220 = vmatprep.mubr.f32.mxu0 0.0
    %2221 = vmatmul.mubr.f32.gmra.mxu0 %v2154
    %v2222 = vpop.f32.mrf.mxu0
    %v2223 = vadd.f32 %v2152, %v2222
    %v2224 = vpop.f32.mrf.mxu0
    %2225 = vdwg.mxu0
    %v2226 = vadd.f32 %v1990, %v2223
    %v2227 = vsel %vm44, %v2226, 0.0
    %2228 = vadd.xlane.f32.xlu0 %v2227
    %v2229 = vpop.xlane.xlu0 %2228
    %v2230 = vmul.f32 %v2229, %v880
    %v2231 = vsub.f32 %v2226, %v2230
    %v2232 = vmul.f32 %v2231, %v2231
    %v2233 = vsel %vm44, %v2232, 0.0
    %2234 = vadd.xlane.f32.xlu0 %v2233
    %v2235 = vpop.xlane.xlu0 %2234
    %v2236 = vmul.f32 %v2235, %v880
    %v2237 = vadd.f32 %v2236, 1e-05
    %v2238 = vrsqrt.pop %v2237
    %v2239 = vmul.f32 %v2231, %v2238
    %v2240 = vlaneseq
    %v2241 = vshrl.u32 %v2240, 7
    %v2242 = vsub.s32 4, %v2241
    %v2243 = vrot.slane %v1161, %v2242
    %v2244 = vmul.f32 %v2239, %v2243
    %v2245 = vlaneseq
    %v2246 = vshrl.u32 %v2245, 7
    %v2247 = vsub.s32 5, %v2246
    %v2248 = vrot.slane %v1161, %v2247
    %v2249 = vadd.f32 %v2244, %v2248
    %2250 = vst.msk [vmem:[#allocation2] sm:$0xff] %vm44, %v2249
    // Predicated region
    $region22: #{tpu_custom_call.1} parent=1 // pred_check
      _
    $region23: #{tpu_custom_call.1} parent=1 // pred_check_branch
      %2252 = sbr.rel (0) target = $region25
    $region24: #{tpu_custom_call.1} parent=1 // pred_region
      %s2254 = ssub.s32 128, 128
      %2255 = vsyncadd [#allocation3], %s2254
      %s2257 = sshll.u32 [#allocation2], 4
      %s2258 = int_to_ptr.vmem [resolvable:$true] %s2257
      %2260 = dma.vmem_to_hbm [thread:$0]  %s2258, 128, %s5, [#allocation3]
    $region25: #{tpu_custom_call.1} parent=1 // pred_fallthru
      _
    // Predicated region
    $region26: #{tpu_custom_call.1} parent=1 // pred_check
      _
    $region27: #{tpu_custom_call.1} parent=1 // pred_check_branch
      %2262 = sbr.rel (0) target = $region29
    $region28: #{tpu_custom_call.1} parent=1 // pred_region
      %2263 = dma.done [#allocation3], 128
    $region29: #{tpu_custom_call.1} parent=1 // pred_fallthru
      _
    %2264 = vsyncpa [#allocation3], 1

</llo_original>
